<compile_context>
chip_gen: v7x
topology: tpu7x:2x2x1
jax: 0.10.0
libtpu: 0.0.40
codegen_flags: <defaults>
</compile_context>

<pallas_src>
import numpy as np
import jax
import jax.numpy as jnp
from jax import lax
from jax.experimental import pallas as pl
from jax.experimental.pallas import tpu as pltpu

# tap t = (oi + 1) * 3 + (oj + 1): matches a (3, 3, Cin, Cout) kernel
# reshaped row-major from the per-tap (9, Cin, Cout) storage.
TAP_OFFSETS = tuple((oi, oj) for oi in (-1, 0, 1) for oj in (-1, 0, 1))


def make_tap_masks(H, W):
    """masks[t, 0, p] = 1 iff the 3x3 tap t of output pixel p is inside the image."""
    P = H * W
    masks = np.zeros((9, 1, P), np.float32)
    for t, (oi, oj) in enumerate(TAP_OFFSETS):
        for i in range(H):
            if not (0 <= i + oi < H):
                continue
            for j in range(W):
                if 0 <= j + oj < W:
                    masks[t, 0, i * W + j] = 1.0
    return jnp.asarray(masks)


def fold_bn(gamma, beta, mean, var, eps=1e-5):
    """Eval-mode BatchNorm folded to per-channel scale a and shift b."""
    a = gamma / jnp.sqrt(var + eps)
    b = beta - mean * a
    return a.astype(jnp.float32), b.astype(jnp.float32)


def basic_block_forward(x_nchw, W1, W2, a0, b0, a1, b1, a2, b2,
                        *, compute_dtype=jnp.bfloat16):
    """Fused BasicBlock forward.  x is NCHW; W1/W2 are per-tap (9, Cin, Cout)."""
    N, Cin, H, Wsp = x_nchw.shape
    P = H * Wsp
    Cout = W1.shape[-1]
    assert Cin == Cout, "residual add requires inplanes == planes (downsample=None)"
    assert Cin % 8 == 0, "channel count must be a multiple of 8 (sublane tile)"

    # Channels on sublanes, flattened spatial P = H*W on lanes (lane-dense).
    # NCHW -> (N, C, P) is a pure reshape.
    x_cp = x_nchw.reshape(N, Cin, P).astype(jnp.float32)

    # Per-tap weights (9, Cin, Cout) -> single im2col matrix (Cout, 9*Cin):
    # element [co, t*Cin + ci] = W[t, ci, co].
    w1_cat = jnp.transpose(W1, (2, 0, 1)).reshape(Cout, 9 * Cin).astype(compute_dtype)
    w2_cat = jnp.transpose(W2, (2, 0, 1)).reshape(Cout, 9 * Cout).astype(compute_dtype)

    masks = make_tap_masks(H, Wsp)                              # (9, 1, P) f32

    def colvec(v):                                              # (C,) -> (C, 1)
        return jnp.asarray(v, jnp.float32).reshape(-1, 1)

    a0c, b0c, a1c, b1c, a2c, b2c = map(colvec, (a0, b0, a1, b1, a2, b2))

    def kernel(x_ref, w1_ref, w2_ref, m_ref,
               a0_ref, b0_ref, a1_ref, b1_ref, a2_ref, b2_ref,
               o_ref, col_ref):
        x = x_ref[0]                                            # (Cin, P) raw input (residual)
        y0 = x * a0_ref[...] + b0_ref[...]                      # bn0

        def im2col(y):
            # Zero-FLOP spatial shifts: lane roll + boundary mask, staged into
            # the VMEM scratch (f32, tile-aligned 8-row writes).
            for t, (oi, oj) in enumerate(TAP_OFFSETS):
                s = oi * Wsp + oj                               # flattened neighbour offset
                shifted = y if s == 0 else pltpu.roll(y, (-s) % P, axis=1)
                col_ref[t * Cin:(t + 1) * Cin, :] = shifted * m_ref[t]

        # conv1: one (Cout, 9*Cin) x (9*Cin, P) matmul on the MXU.
        im2col(y0)
        c1 = jnp.dot(w1_ref[...], col_ref[...].astype(compute_dtype),
                     preferred_element_type=jnp.float32)        # (Cout, P) f32
        y1 = c1 * a1_ref[...] + b1_ref[...]                     # bn1

        # conv2
        im2col(y1)
        c2 = jnp.dot(w2_ref[...], col_ref[...].astype(compute_dtype),
                     preferred_element_type=jnp.float32)
        y2 = c2 * a2_ref[...] + b2_ref[...]                     # bn2

        o_ref[0] = (y2 + x).astype(o_ref.dtype)                 # residual add

    def full(shape):
        nd = len(shape)
        return pl.BlockSpec(shape, lambda n, _nd=nd: (0,) * _nd)

    out = pl.pallas_call(
        kernel,
        out_shape=jax.ShapeDtypeStruct((N, Cout, P), jnp.float32),
        grid=(N,),
        in_specs=[
            pl.BlockSpec((1, Cin, P), lambda n: (n, 0, 0)),     # x (per-batch block)
            full((Cout, 9 * Cin)),                              # conv1 im2col weights
            full((Cout, 9 * Cout)),                             # conv2 im2col weights
            full((9, 1, P)),                                    # tap boundary masks
            full((Cin, 1)), full((Cin, 1)),                     # bn0 scale / shift
            full((Cout, 1)), full((Cout, 1)),                   # bn1 scale / shift
            full((Cout, 1)), full((Cout, 1)),                   # bn2 scale / shift
        ],
        out_specs=pl.BlockSpec((1, Cout, P), lambda n: (n, 0, 0)),
        scratch_shapes=[pltpu.VMEM((9 * Cin, P), jnp.float32)], # im2col buffer
        compiler_params=pltpu.CompilerParams(
            dimension_semantics=("parallel",)),                 # batch across TCs (v7x)
    )(x_cp, w1_cat, w2_cat, masks, a0c, b0c, a1c, b1c, a2c, b2c)

    return out.reshape(N, Cout, H, Wsp)                         # (N, C, P) -> NCHW


def reference_forward(x_nchw, W1, W2, a0, b0, a1, b1, a2, b2):
    """Pure-JAX reference using lax.conv (full f32 precision) for correctness."""
    N, Cin, H, Wsp = x_nchw.shape
    Cout = W1.shape[-1]
    x = jnp.transpose(x_nchw, (0, 2, 3, 1)).astype(jnp.float32)   # NHWC
    dn = ("NHWC", "HWIO", "NHWC")
    w1_hwio = W1.reshape(3, 3, Cin, Cout)     # tap ordering matches TAP_OFFSETS
    w2_hwio = W2.reshape(3, 3, Cout, Cout)

    def bn(v, a, b):
        return v * a.reshape(1, 1, 1, -1) + b.reshape(1, 1, 1, -1)

    y0 = bn(x, a0, b0)
    c1 = lax.conv_general_dilated(y0, w1_hwio, (1, 1), ((1, 1), (1, 1)),
                                  dimension_numbers=dn,
                                  precision=lax.Precision.HIGHEST)
    y1 = bn(c1, a1, b1)
    c2 = lax.conv_general_dilated(y1, w2_hwio, (1, 1), ((1, 1), (1, 1)),
                                  dimension_numbers=dn,
                                  precision=lax.Precision.HIGHEST)
    y2 = bn(c2, a2, b2)
    return jnp.transpose(y2 + x, (0, 3, 1, 2))


if __name__ == "__main__":
    # Small, self-consistent shapes: inplanes = planes = 8, stride = 1.
    N, C, H, W = 2, 8, 16, 16
    key = jax.random.PRNGKey(0)
    ks = jax.random.split(key, 8)

    x = jax.random.normal(ks[0], (N, C, H, W), jnp.float32)

    # conv weights stored per tap: (9, Cin, Cout)  (tap t <-> w_torch[:, :, t//3, t%3].T)
    W1 = jax.random.normal(ks[1], (9, C, C), jnp.float32) / np.sqrt(9 * C)
    W2 = jax.random.normal(ks[2], (9, C, C), jnp.float32) / np.sqrt(9 * C)

    def bn_params(k):
        k1, k2, k3, k4 = jax.random.split(k, 4)
        gamma = jax.random.uniform(k1, (C,), jnp.float32, 0.5, 1.5)
        beta = 0.1 * jax.random.normal(k2, (C,), jnp.float32)
        mean = 0.1 * jax.random.normal(k3, (C,), jnp.float32)
        var = jax.random.uniform(k4, (C,), jnp.float32, 0.5, 1.5)
        return fold_bn(gamma, beta, mean, var)

    a0, b0 = bn_params(ks[3])   # bn0 (affine=bnaff=True)
    a1, b1 = bn_params(ks[4])   # bn1
    a2, b2 = bn_params(ks[5])   # bn2

    ref = jax.block_until_ready(reference_forward(x, W1, W2, a0, b0, a1, b1, a2, b2))

    # f32 MXU path: tight tolerance (300x tighter than before) — any tap-order /
    # transpose / roll-direction mistake produces O(1) errors and is caught here.
    out_f32 = jax.block_until_ready(
        basic_block_forward(x, W1, W2, a0, b0, a1, b1, a2, b2,
                            compute_dtype=jnp.float32))
    assert out_f32.shape == (N, C, H, W) and out_f32.dtype == jnp.float32
    np.testing.assert_allclose(np.asarray(out_f32), np.asarray(ref),
                               rtol=1e-4, atol=1e-4)

    # bf16 MXU operand path (v6e/v7x fast path), f32 accumulation.
    out_bf16 = jax.block_until_ready(
        basic_block_forward(x, W1, W2, a0, b0, a1, b1, a2, b2,
                            compute_dtype=jnp.bfloat16))
    assert out_bf16.shape == (N, C, H, W) and out_bf16.dtype == jnp.float32
    np.testing.assert_allclose(np.asarray(out_bf16), np.asarray(ref),
                               rtol=2e-2, atol=2e-2)

    print("KERNEL_OK")
</pallas_src>

<mosaic_0001>
module attributes {stable_mosaic.version = 11 : i64} {
  func.func @kernel(%arg0: i32, %arg1: memref<1x8x256xf32, #tpu.memory_space<vmem>>, %arg2: memref<8x72xf32, #tpu.memory_space<vmem>>, %arg3: memref<8x72xf32, #tpu.memory_space<vmem>>, %arg4: memref<9x1x256xf32, #tpu.memory_space<vmem>>, %arg5: memref<8x1xf32, #tpu.memory_space<vmem>>, %arg6: memref<8x1xf32, #tpu.memory_space<vmem>>, %arg7: memref<8x1xf32, #tpu.memory_space<vmem>>, %arg8: memref<8x1xf32, #tpu.memory_space<vmem>>, %arg9: memref<8x1xf32, #tpu.memory_space<vmem>>, %arg10: memref<8x1xf32, #tpu.memory_space<vmem>>, %arg11: memref<1x8x256xf32, #tpu.memory_space<vmem>>, %arg12: memref<72x256xf32, #tpu.memory_space<vmem>>) attributes {dimension_semantics = [#tpu.dimension_semantics<parallel>], iteration_bounds = array<i64: 2>, scalar_prefetch = 0 : i64, scratch_operands = 1 : i64, tpu.core_type = #tpu.core_type<tc>, window_params = [{transform_indices = @transform_0, window_bounds = array<i64: 1, 8, 256>}, {pipeline_mode = #tpu.pipeline_mode<synchronous>, transform_indices = @transform_1, window_bounds = array<i64: 8, 72>}, {pipeline_mode = #tpu.pipeline_mode<synchronous>, transform_indices = @transform_2, window_bounds = array<i64: 8, 72>}, {pipeline_mode = #tpu.pipeline_mode<synchronous>, transform_indices = @transform_3, window_bounds = array<i64: 9, 1, 256>}, {pipeline_mode = #tpu.pipeline_mode<synchronous>, transform_indices = @transform_4, window_bounds = array<i64: 8, 1>}, {pipeline_mode = #tpu.pipeline_mode<synchronous>, transform_indices = @transform_5, window_bounds = array<i64: 8, 1>}, {pipeline_mode = #tpu.pipeline_mode<synchronous>, transform_indices = @transform_6, window_bounds = array<i64: 8, 1>}, {pipeline_mode = #tpu.pipeline_mode<synchronous>, transform_indices = @transform_7, window_bounds = array<i64: 8, 1>}, {pipeline_mode = #tpu.pipeline_mode<synchronous>, transform_indices = @transform_8, window_bounds = array<i64: 8, 1>}, {pipeline_mode = #tpu.pipeline_mode<synchronous>, transform_indices = @transform_9, window_bounds = array<i64: 8, 1>}, {transform_indices = @transform_10, window_bounds = array<i64: 1, 8, 256>}]} {
    %c0 = arith.constant 0 : index
    %c0_0 = arith.constant 0 : index
    %c0_1 = arith.constant 0 : index
    %0 = vector.load %arg1[%c0, %c0_0, %c0_1] : memref<1x8x256xf32, #tpu.memory_space<vmem>>, vector<1x8x256xf32>
    %1 = vector.shape_cast %0 : vector<1x8x256xf32> to vector<8x256xf32>
    %c0_2 = arith.constant 0 : index
    %c0_3 = arith.constant 0 : index
    %2 = vector.load %arg5[%c0_2, %c0_3] : memref<8x1xf32, #tpu.memory_space<vmem>>, vector<8x1xf32>
    %3 = vector.broadcast %2 : vector<8x1xf32> to vector<8x256xf32>
    %4 = arith.mulf %1, %3 : vector<8x256xf32>
    %c0_4 = arith.constant 0 : index
    %c0_5 = arith.constant 0 : index
    %5 = vector.load %arg6[%c0_4, %c0_5] : memref<8x1xf32, #tpu.memory_space<vmem>>, vector<8x1xf32>
    %6 = vector.broadcast %5 : vector<8x1xf32> to vector<8x256xf32>
    %7 = arith.addf %4, %6 : vector<8x256xf32>
    %c17_i32 = arith.constant 17 : i32
    %8 = tpu.dynamic_rotate %7 by %c17_i32 dim 1 : vector<8x256xf32>, i32 -> vector<8x256xf32>
    %c0_6 = arith.constant 0 : index
    %c0_7 = arith.constant 0 : index
    %c0_8 = arith.constant 0 : index
    %9 = vector.load %arg4[%c0_6, %c0_7, %c0_8] : memref<9x1x256xf32, #tpu.memory_space<vmem>>, vector<1x1x256xf32>
    %10 = vector.shape_cast %9 : vector<1x1x256xf32> to vector<1x256xf32>
    %11 = vector.broadcast %10 : vector<1x256xf32> to vector<8x256xf32>
    %12 = arith.mulf %8, %11 : vector<8x256xf32>
    %c0_9 = arith.constant 0 : index
    %c0_10 = arith.constant 0 : index
    %13 = vector.load %arg12[%c0_9, %c0_10] : memref<72x256xf32, #tpu.memory_space<vmem>>, vector<8x256xf32>
    tpu.vector_store %arg12[%c0_9, %c0_10], %12 {strides = array<i32>} : memref<72x256xf32, #tpu.memory_space<vmem>>, vector<8x256xf32>,
    %c16_i32 = arith.constant 16 : i32
    %14 = tpu.dynamic_rotate %7 by %c16_i32 dim 1 : vector<8x256xf32>, i32 -> vector<8x256xf32>
    %c1 = arith.constant 1 : index
    %c0_11 = arith.constant 0 : index
    %c0_12 = arith.constant 0 : index
    %15 = vector.load %arg4[%c1, %c0_11, %c0_12] : memref<9x1x256xf32, #tpu.memory_space<vmem>>, vector<1x1x256xf32>
    %16 = vector.shape_cast %15 : vector<1x1x256xf32> to vector<1x256xf32>
    %17 = vector.broadcast %16 : vector<1x256xf32> to vector<8x256xf32>
    %18 = arith.mulf %14, %17 : vector<8x256xf32>
    %c8 = arith.constant 8 : index
    %c0_13 = arith.constant 0 : index
    %19 = vector.load %arg12[%c8, %c0_13] : memref<72x256xf32, #tpu.memory_space<vmem>>, vector<8x256xf32>
    tpu.vector_store %arg12[%c8, %c0_13], %18 {strides = array<i32>} : memref<72x256xf32, #tpu.memory_space<vmem>>, vector<8x256xf32>,
    %c15_i32 = arith.constant 15 : i32
    %20 = tpu.dynamic_rotate %7 by %c15_i32 dim 1 : vector<8x256xf32>, i32 -> vector<8x256xf32>
    %c2 = arith.constant 2 : index
    %c0_14 = arith.constant 0 : index
    %c0_15 = arith.constant 0 : index
    %21 = vector.load %arg4[%c2, %c0_14, %c0_15] : memref<9x1x256xf32, #tpu.memory_space<vmem>>, vector<1x1x256xf32>
    %22 = vector.shape_cast %21 : vector<1x1x256xf32> to vector<1x256xf32>
    %23 = vector.broadcast %22 : vector<1x256xf32> to vector<8x256xf32>
    %24 = arith.mulf %20, %23 : vector<8x256xf32>
    %c16 = arith.constant 16 : index
    %c0_16 = arith.constant 0 : index
    %25 = vector.load %arg12[%c16, %c0_16] : memref<72x256xf32, #tpu.memory_space<vmem>>, vector<8x256xf32>
    tpu.vector_store %arg12[%c16, %c0_16], %24 {strides = array<i32>} : memref<72x256xf32, #tpu.memory_space<vmem>>, vector<8x256xf32>,
    %c1_i32 = arith.constant 1 : i32
    %26 = tpu.dynamic_rotate %7 by %c1_i32 dim 1 : vector<8x256xf32>, i32 -> vector<8x256xf32>
    %c3 = arith.constant 3 : index
    %c0_17 = arith.constant 0 : index
    %c0_18 = arith.constant 0 : index
    %27 = vector.load %arg4[%c3, %c0_17, %c0_18] : memref<9x1x256xf32, #tpu.memory_space<vmem>>, vector<1x1x256xf32>
    %28 = vector.shape_cast %27 : vector<1x1x256xf32> to vector<1x256xf32>
    %29 = vector.broadcast %28 : vector<1x256xf32> to vector<8x256xf32>
    %30 = arith.mulf %26, %29 : vector<8x256xf32>
    %c24 = arith.constant 24 : index
    %c0_19 = arith.constant 0 : index
    %31 = vector.load %arg12[%c24, %c0_19] : memref<72x256xf32, #tpu.memory_space<vmem>>, vector<8x256xf32>
    tpu.vector_store %arg12[%c24, %c0_19], %30 {strides = array<i32>} : memref<72x256xf32, #tpu.memory_space<vmem>>, vector<8x256xf32>,
    %c4 = arith.constant 4 : index
    %c0_20 = arith.constant 0 : index
    %c0_21 = arith.constant 0 : index
    %32 = vector.load %arg4[%c4, %c0_20, %c0_21] : memref<9x1x256xf32, #tpu.memory_space<vmem>>, vector<1x1x256xf32>
    %33 = vector.shape_cast %32 : vector<1x1x256xf32> to vector<1x256xf32>
    %34 = vector.broadcast %33 : vector<1x256xf32> to vector<8x256xf32>
    %35 = arith.mulf %7, %34 : vector<8x256xf32>
    %c32 = arith.constant 32 : index
    %c0_22 = arith.constant 0 : index
    %36 = vector.load %arg12[%c32, %c0_22] : memref<72x256xf32, #tpu.memory_space<vmem>>, vector<8x256xf32>
    tpu.vector_store %arg12[%c32, %c0_22], %35 {strides = array<i32>} : memref<72x256xf32, #tpu.memory_space<vmem>>, vector<8x256xf32>,
    %c255_i32 = arith.constant 255 : i32
    %37 = tpu.dynamic_rotate %7 by %c255_i32 dim 1 : vector<8x256xf32>, i32 -> vector<8x256xf32>
    %c5 = arith.constant 5 : index
    %c0_23 = arith.constant 0 : index
    %c0_24 = arith.constant 0 : index
    %38 = vector.load %arg4[%c5, %c0_23, %c0_24] : memref<9x1x256xf32, #tpu.memory_space<vmem>>, vector<1x1x256xf32>
    %39 = vector.shape_cast %38 : vector<1x1x256xf32> to vector<1x256xf32>
    %40 = vector.broadcast %39 : vector<1x256xf32> to vector<8x256xf32>
    %41 = arith.mulf %37, %40 : vector<8x256xf32>
    %c40 = arith.constant 40 : index
    %c0_25 = arith.constant 0 : index
    %42 = vector.load %arg12[%c40, %c0_25] : memref<72x256xf32, #tpu.memory_space<vmem>>, vector<8x256xf32>
    tpu.vector_store %arg12[%c40, %c0_25], %41 {strides = array<i32>} : memref<72x256xf32, #tpu.memory_space<vmem>>, vector<8x256xf32>,
    %c241_i32 = arith.constant 241 : i32
    %43 = tpu.dynamic_rotate %7 by %c241_i32 dim 1 : vector<8x256xf32>, i32 -> vector<8x256xf32>
    %c6 = arith.constant 6 : index
    %c0_26 = arith.constant 0 : index
    %c0_27 = arith.constant 0 : index
    %44 = vector.load %arg4[%c6, %c0_26, %c0_27] : memref<9x1x256xf32, #tpu.memory_space<vmem>>, vector<1x1x256xf32>
    %45 = vector.shape_cast %44 : vector<1x1x256xf32> to vector<1x256xf32>
    %46 = vector.broadcast %45 : vector<1x256xf32> to vector<8x256xf32>
    %47 = arith.mulf %43, %46 : vector<8x256xf32>
    %c48 = arith.constant 48 : index
    %c0_28 = arith.constant 0 : index
    %48 = vector.load %arg12[%c48, %c0_28] : memref<72x256xf32, #tpu.memory_space<vmem>>, vector<8x256xf32>
    tpu.vector_store %arg12[%c48, %c0_28], %47 {strides = array<i32>} : memref<72x256xf32, #tpu.memory_space<vmem>>, vector<8x256xf32>,
    %c240_i32 = arith.constant 240 : i32
    %49 = tpu.dynamic_rotate %7 by %c240_i32 dim 1 : vector<8x256xf32>, i32 -> vector<8x256xf32>
    %c7 = arith.constant 7 : index
    %c0_29 = arith.constant 0 : index
    %c0_30 = arith.constant 0 : index
    %50 = vector.load %arg4[%c7, %c0_29, %c0_30] : memref<9x1x256xf32, #tpu.memory_space<vmem>>, vector<1x1x256xf32>
    %51 = vector.shape_cast %50 : vector<1x1x256xf32> to vector<1x256xf32>
    %52 = vector.broadcast %51 : vector<1x256xf32> to vector<8x256xf32>
    %53 = arith.mulf %49, %52 : vector<8x256xf32>
    %c56 = arith.constant 56 : index
    %c0_31 = arith.constant 0 : index
    %54 = vector.load %arg12[%c56, %c0_31] : memref<72x256xf32, #tpu.memory_space<vmem>>, vector<8x256xf32>
    tpu.vector_store %arg12[%c56, %c0_31], %53 {strides = array<i32>} : memref<72x256xf32, #tpu.memory_space<vmem>>, vector<8x256xf32>,
    %c239_i32 = arith.constant 239 : i32
    %55 = tpu.dynamic_rotate %7 by %c239_i32 dim 1 : vector<8x256xf32>, i32 -> vector<8x256xf32>
    %c8_32 = arith.constant 8 : index
    %c0_33 = arith.constant 0 : index
    %c0_34 = arith.constant 0 : index
    %56 = vector.load %arg4[%c8_32, %c0_33, %c0_34] : memref<9x1x256xf32, #tpu.memory_space<vmem>>, vector<1x1x256xf32>
    %57 = vector.shape_cast %56 : vector<1x1x256xf32> to vector<1x256xf32>
    %58 = vector.broadcast %57 : vector<1x256xf32> to vector<8x256xf32>
    %59 = arith.mulf %55, %58 : vector<8x256xf32>
    %c64 = arith.constant 64 : index
    %c0_35 = arith.constant 0 : index
    %60 = vector.load %arg12[%c64, %c0_35] : memref<72x256xf32, #tpu.memory_space<vmem>>, vector<8x256xf32>
    tpu.vector_store %arg12[%c64, %c0_35], %59 {strides = array<i32>} : memref<72x256xf32, #tpu.memory_space<vmem>>, vector<8x256xf32>,
    %c0_36 = arith.constant 0 : index
    %c0_37 = arith.constant 0 : index
    %61 = vector.load %arg2[%c0_36, %c0_37] : memref<8x72xf32, #tpu.memory_space<vmem>>, vector<8x72xf32>
    %c0_38 = arith.constant 0 : index
    %c0_39 = arith.constant 0 : index
    %62 = vector.load %arg12[%c0_38, %c0_39] : memref<72x256xf32, #tpu.memory_space<vmem>>, vector<72x256xf32>
    %cst = arith.constant dense<0.000000e+00> : vector<8x256xf32>
    %63 = tpu.matmul %61, %62, %cst {dimension_numbers = #tpu.dot_dimension_numbers<[1], [0], [0], [1], [0, 0, 1, 1], [], []>} : vector<8x72xf32>, vector<72x256xf32>, vector<8x256xf32> -> vector<8x256xf32>
    %c0_40 = arith.constant 0 : index
    %c0_41 = arith.constant 0 : index
    %64 = vector.load %arg7[%c0_40, %c0_41] : memref<8x1xf32, #tpu.memory_space<vmem>>, vector<8x1xf32>
    %65 = vector.broadcast %64 : vector<8x1xf32> to vector<8x256xf32>
    %66 = arith.mulf %63, %65 : vector<8x256xf32>
    %c0_42 = arith.constant 0 : index
    %c0_43 = arith.constant 0 : index
    %67 = vector.load %arg8[%c0_42, %c0_43] : memref<8x1xf32, #tpu.memory_space<vmem>>, vector<8x1xf32>
    %68 = vector.broadcast %67 : vector<8x1xf32> to vector<8x256xf32>
    %69 = arith.addf %66, %68 : vector<8x256xf32>
    %c17_i32_44 = arith.constant 17 : i32
    %70 = tpu.dynamic_rotate %69 by %c17_i32_44 dim 1 : vector<8x256xf32>, i32 -> vector<8x256xf32>
    %c0_45 = arith.constant 0 : index
    %c0_46 = arith.constant 0 : index
    %c0_47 = arith.constant 0 : index
    %71 = vector.load %arg4[%c0_45, %c0_46, %c0_47] : memref<9x1x256xf32, #tpu.memory_space<vmem>>, vector<1x1x256xf32>
    %72 = vector.shape_cast %71 : vector<1x1x256xf32> to vector<1x256xf32>
    %73 = vector.broadcast %72 : vector<1x256xf32> to vector<8x256xf32>
    %74 = arith.mulf %70, %73 : vector<8x256xf32>
    %c0_48 = arith.constant 0 : index
    %c0_49 = arith.constant 0 : index
    %75 = vector.load %arg12[%c0_48, %c0_49] : memref<72x256xf32, #tpu.memory_space<vmem>>, vector<8x256xf32>
    tpu.vector_store %arg12[%c0_48, %c0_49], %74 {strides = array<i32>} : memref<72x256xf32, #tpu.memory_space<vmem>>, vector<8x256xf32>,
    %c16_i32_50 = arith.constant 16 : i32
    %76 = tpu.dynamic_rotate %69 by %c16_i32_50 dim 1 : vector<8x256xf32>, i32 -> vector<8x256xf32>
    %c1_51 = arith.constant 1 : index
    %c0_52 = arith.constant 0 : index
    %c0_53 = arith.constant 0 : index
    %77 = vector.load %arg4[%c1_51, %c0_52, %c0_53] : memref<9x1x256xf32, #tpu.memory_space<vmem>>, vector<1x1x256xf32>
    %78 = vector.shape_cast %77 : vector<1x1x256xf32> to vector<1x256xf32>
    %79 = vector.broadcast %78 : vector<1x256xf32> to vector<8x256xf32>
    %80 = arith.mulf %76, %79 : vector<8x256xf32>
    %c8_54 = arith.constant 8 : index
    %c0_55 = arith.constant 0 : index
    %81 = vector.load %arg12[%c8_54, %c0_55] : memref<72x256xf32, #tpu.memory_space<vmem>>, vector<8x256xf32>
    tpu.vector_store %arg12[%c8_54, %c0_55], %80 {strides = array<i32>} : memref<72x256xf32, #tpu.memory_space<vmem>>, vector<8x256xf32>,
    %c15_i32_56 = arith.constant 15 : i32
    %82 = tpu.dynamic_rotate %69 by %c15_i32_56 dim 1 : vector<8x256xf32>, i32 -> vector<8x256xf32>
    %c2_57 = arith.constant 2 : index
    %c0_58 = arith.constant 0 : index
    %c0_59 = arith.constant 0 : index
    %83 = vector.load %arg4[%c2_57, %c0_58, %c0_59] : memref<9x1x256xf32, #tpu.memory_space<vmem>>, vector<1x1x256xf32>
    %84 = vector.shape_cast %83 : vector<1x1x256xf32> to vector<1x256xf32>
    %85 = vector.broadcast %84 : vector<1x256xf32> to vector<8x256xf32>
    %86 = arith.mulf %82, %85 : vector<8x256xf32>
    %c16_60 = arith.constant 16 : index
    %c0_61 = arith.constant 0 : index
    %87 = vector.load %arg12[%c16_60, %c0_61] : memref<72x256xf32, #tpu.memory_space<vmem>>, vector<8x256xf32>
    tpu.vector_store %arg12[%c16_60, %c0_61], %86 {strides = array<i32>} : memref<72x256xf32, #tpu.memory_space<vmem>>, vector<8x256xf32>,
    %c1_i32_62 = arith.constant 1 : i32
    %88 = tpu.dynamic_rotate %69 by %c1_i32_62 dim 1 : vector<8x256xf32>, i32 -> vector<8x256xf32>
    %c3_63 = arith.constant 3 : index
    %c0_64 = arith.constant 0 : index
    %c0_65 = arith.constant 0 : index
    %89 = vector.load %arg4[%c3_63, %c0_64, %c0_65] : memref<9x1x256xf32, #tpu.memory_space<vmem>>, vector<1x1x256xf32>
    %90 = vector.shape_cast %89 : vector<1x1x256xf32> to vector<1x256xf32>
    %91 = vector.broadcast %90 : vector<1x256xf32> to vector<8x256xf32>
    %92 = arith.mulf %88, %91 : vector<8x256xf32>
    %c24_66 = arith.constant 24 : index
    %c0_67 = arith.constant 0 : index
    %93 = vector.load %arg12[%c24_66, %c0_67] : memref<72x256xf32, #tpu.memory_space<vmem>>, vector<8x256xf32>
    tpu.vector_store %arg12[%c24_66, %c0_67], %92 {strides = array<i32>} : memref<72x256xf32, #tpu.memory_space<vmem>>, vector<8x256xf32>,
    %c4_68 = arith.constant 4 : index
    %c0_69 = arith.constant 0 : index
    %c0_70 = arith.constant 0 : index
    %94 = vector.load %arg4[%c4_68, %c0_69, %c0_70] : memref<9x1x256xf32, #tpu.memory_space<vmem>>, vector<1x1x256xf32>
    %95 = vector.shape_cast %94 : vector<1x1x256xf32> to vector<1x256xf32>
    %96 = vector.broadcast %95 : vector<1x256xf32> to vector<8x256xf32>
    %97 = arith.mulf %69, %96 : vector<8x256xf32>
    %c32_71 = arith.constant 32 : index
    %c0_72 = arith.constant 0 : index
    %98 = vector.load %arg12[%c32_71, %c0_72] : memref<72x256xf32, #tpu.memory_space<vmem>>, vector<8x256xf32>
    tpu.vector_store %arg12[%c32_71, %c0_72], %97 {strides = array<i32>} : memref<72x256xf32, #tpu.memory_space<vmem>>, vector<8x256xf32>,
    %c255_i32_73 = arith.constant 255 : i32
    %99 = tpu.dynamic_rotate %69 by %c255_i32_73 dim 1 : vector<8x256xf32>, i32 -> vector<8x256xf32>
    %c5_74 = arith.constant 5 : index
    %c0_75 = arith.constant 0 : index
    %c0_76 = arith.constant 0 : index
    %100 = vector.load %arg4[%c5_74, %c0_75, %c0_76] : memref<9x1x256xf32, #tpu.memory_space<vmem>>, vector<1x1x256xf32>
    %101 = vector.shape_cast %100 : vector<1x1x256xf32> to vector<1x256xf32>
    %102 = vector.broadcast %101 : vector<1x256xf32> to vector<8x256xf32>
    %103 = arith.mulf %99, %102 : vector<8x256xf32>
    %c40_77 = arith.constant 40 : index
    %c0_78 = arith.constant 0 : index
    %104 = vector.load %arg12[%c40_77, %c0_78] : memref<72x256xf32, #tpu.memory_space<vmem>>, vector<8x256xf32>
    tpu.vector_store %arg12[%c40_77, %c0_78], %103 {strides = array<i32>} : memref<72x256xf32, #tpu.memory_space<vmem>>, vector<8x256xf32>,
    %c241_i32_79 = arith.constant 241 : i32
    %105 = tpu.dynamic_rotate %69 by %c241_i32_79 dim 1 : vector<8x256xf32>, i32 -> vector<8x256xf32>
    %c6_80 = arith.constant 6 : index
    %c0_81 = arith.constant 0 : index
    %c0_82 = arith.constant 0 : index
    %106 = vector.load %arg4[%c6_80, %c0_81, %c0_82] : memref<9x1x256xf32, #tpu.memory_space<vmem>>, vector<1x1x256xf32>
    %107 = vector.shape_cast %106 : vector<1x1x256xf32> to vector<1x256xf32>
    %108 = vector.broadcast %107 : vector<1x256xf32> to vector<8x256xf32>
    %109 = arith.mulf %105, %108 : vector<8x256xf32>
    %c48_83 = arith.constant 48 : index
    %c0_84 = arith.constant 0 : index
    %110 = vector.load %arg12[%c48_83, %c0_84] : memref<72x256xf32, #tpu.memory_space<vmem>>, vector<8x256xf32>
    tpu.vector_store %arg12[%c48_83, %c0_84], %109 {strides = array<i32>} : memref<72x256xf32, #tpu.memory_space<vmem>>, vector<8x256xf32>,
    %c240_i32_85 = arith.constant 240 : i32
    %111 = tpu.dynamic_rotate %69 by %c240_i32_85 dim 1 : vector<8x256xf32>, i32 -> vector<8x256xf32>
    %c7_86 = arith.constant 7 : index
    %c0_87 = arith.constant 0 : index
    %c0_88 = arith.constant 0 : index
    %112 = vector.load %arg4[%c7_86, %c0_87, %c0_88] : memref<9x1x256xf32, #tpu.memory_space<vmem>>, vector<1x1x256xf32>
    %113 = vector.shape_cast %112 : vector<1x1x256xf32> to vector<1x256xf32>
    %114 = vector.broadcast %113 : vector<1x256xf32> to vector<8x256xf32>
    %115 = arith.mulf %111, %114 : vector<8x256xf32>
    %c56_89 = arith.constant 56 : index
    %c0_90 = arith.constant 0 : index
    %116 = vector.load %arg12[%c56_89, %c0_90] : memref<72x256xf32, #tpu.memory_space<vmem>>, vector<8x256xf32>
    tpu.vector_store %arg12[%c56_89, %c0_90], %115 {strides = array<i32>} : memref<72x256xf32, #tpu.memory_space<vmem>>, vector<8x256xf32>,
    %c239_i32_91 = arith.constant 239 : i32
    %117 = tpu.dynamic_rotate %69 by %c239_i32_91 dim 1 : vector<8x256xf32>, i32 -> vector<8x256xf32>
    %c8_92 = arith.constant 8 : index
    %c0_93 = arith.constant 0 : index
    %c0_94 = arith.constant 0 : index
    %118 = vector.load %arg4[%c8_92, %c0_93, %c0_94] : memref<9x1x256xf32, #tpu.memory_space<vmem>>, vector<1x1x256xf32>
    %119 = vector.shape_cast %118 : vector<1x1x256xf32> to vector<1x256xf32>
    %120 = vector.broadcast %119 : vector<1x256xf32> to vector<8x256xf32>
    %121 = arith.mulf %117, %120 : vector<8x256xf32>
    %c64_95 = arith.constant 64 : index
    %c0_96 = arith.constant 0 : index
    %122 = vector.load %arg12[%c64_95, %c0_96] : memref<72x256xf32, #tpu.memory_space<vmem>>, vector<8x256xf32>
    tpu.vector_store %arg12[%c64_95, %c0_96], %121 {strides = array<i32>} : memref<72x256xf32, #tpu.memory_space<vmem>>, vector<8x256xf32>,
    %c0_97 = arith.constant 0 : index
    %c0_98 = arith.constant 0 : index
    %123 = vector.load %arg3[%c0_97, %c0_98] : memref<8x72xf32, #tpu.memory_space<vmem>>, vector<8x72xf32>
    %c0_99 = arith.constant 0 : index
    %c0_100 = arith.constant 0 : index
    %124 = vector.load %arg12[%c0_99, %c0_100] : memref<72x256xf32, #tpu.memory_space<vmem>>, vector<72x256xf32>
    %cst_101 = arith.constant dense<0.000000e+00> : vector<8x256xf32>
    %125 = tpu.matmul %123, %124, %cst_101 {dimension_numbers = #tpu.dot_dimension_numbers<[1], [0], [0], [1], [0, 0, 1, 1], [], []>} : vector<8x72xf32>, vector<72x256xf32>, vector<8x256xf32> -> vector<8x256xf32>
    %c0_102 = arith.constant 0 : index
    %c0_103 = arith.constant 0 : index
    %126 = vector.load %arg9[%c0_102, %c0_103] : memref<8x1xf32, #tpu.memory_space<vmem>>, vector<8x1xf32>
    %127 = vector.broadcast %126 : vector<8x1xf32> to vector<8x256xf32>
    %128 = arith.mulf %125, %127 : vector<8x256xf32>
    %c0_104 = arith.constant 0 : index
    %c0_105 = arith.constant 0 : index
    %129 = vector.load %arg10[%c0_104, %c0_105] : memref<8x1xf32, #tpu.memory_space<vmem>>, vector<8x1xf32>
    %130 = vector.broadcast %129 : vector<8x1xf32> to vector<8x256xf32>
    %131 = arith.addf %128, %130 : vector<8x256xf32>
    %132 = arith.addf %131, %1 : vector<8x256xf32>
    %c0_106 = arith.constant 0 : index
    %c0_107 = arith.constant 0 : index
    %c0_108 = arith.constant 0 : index
    %133 = vector.load %arg11[%c0_106, %c0_107, %c0_108] : memref<1x8x256xf32, #tpu.memory_space<vmem>>, vector<1x8x256xf32>
    %134 = vector.shape_cast %133 : vector<1x8x256xf32> to vector<8x256xf32>
    %135 = vector.shape_cast %132 : vector<8x256xf32> to vector<1x8x256xf32>
    tpu.vector_store %arg11[%c0_106, %c0_107, %c0_108], %135 {strides = array<i32>} : memref<1x8x256xf32, #tpu.memory_space<vmem>>, vector<1x8x256xf32>,
    return
  }
  func.func @transform_0(%arg0: i32) -> (i32, i32, i32) {
    %c0_i32 = arith.constant 0 : i32
    %c0_i32_0 = arith.constant 0 : i32
    %c0_i32_1 = arith.constant 0 : i32
    return %arg0, %c0_i32, %c0_i32_0 : i32, i32, i32
  }
  func.func @transform_1(%arg0: i32) -> (i32, i32) {
    %c0_i32 = arith.constant 0 : i32
    %c0_i32_0 = arith.constant 0 : i32
    %c0_i32_1 = arith.constant 0 : i32
    return %c0_i32, %c0_i32_0 : i32, i32
  }
  func.func @transform_2(%arg0: i32) -> (i32, i32) {
    %c0_i32 = arith.constant 0 : i32
    %c0_i32_0 = arith.constant 0 : i32
    %c0_i32_1 = arith.constant 0 : i32
    return %c0_i32, %c0_i32_0 : i32, i32
  }
  func.func @transform_3(%arg0: i32) -> (i32, i32, i32) {
    %c0_i32 = arith.constant 0 : i32
    %c0_i32_0 = arith.constant 0 : i32
    %c0_i32_1 = arith.constant 0 : i32
    %c0_i32_2 = arith.constant 0 : i32
    return %c0_i32, %c0_i32_0, %c0_i32_1 : i32, i32, i32
  }
  func.func @transform_4(%arg0: i32) -> (i32, i32) {
    %c0_i32 = arith.constant 0 : i32
    %c0_i32_0 = arith.constant 0 : i32
    %c0_i32_1 = arith.constant 0 : i32
    return %c0_i32, %c0_i32_0 : i32, i32
  }
  func.func @transform_5(%arg0: i32) -> (i32, i32) {
    %c0_i32 = arith.constant 0 : i32
    %c0_i32_0 = arith.constant 0 : i32
    %c0_i32_1 = arith.constant 0 : i32
    return %c0_i32, %c0_i32_0 : i32, i32
  }
  func.func @transform_6(%arg0: i32) -> (i32, i32) {
    %c0_i32 = arith.constant 0 : i32
    %c0_i32_0 = arith.constant 0 : i32
    %c0_i32_1 = arith.constant 0 : i32
    return %c0_i32, %c0_i32_0 : i32, i32
  }
  func.func @transform_7(%arg0: i32) -> (i32, i32) {
    %c0_i32 = arith.constant 0 : i32
    %c0_i32_0 = arith.constant 0 : i32
    %c0_i32_1 = arith.constant 0 : i32
    return %c0_i32, %c0_i32_0 : i32, i32
  }
  func.func @transform_8(%arg0: i32) -> (i32, i32) {
    %c0_i32 = arith.constant 0 : i32
    %c0_i32_0 = arith.constant 0 : i32
    %c0_i32_1 = arith.constant 0 : i32
    return %c0_i32, %c0_i32_0 : i32, i32
  }
  func.func @transform_9(%arg0: i32) -> (i32, i32) {
    %c0_i32 = arith.constant 0 : i32
    %c0_i32_0 = arith.constant 0 : i32
    %c0_i32_1 = arith.constant 0 : i32
    return %c0_i32, %c0_i32_0 : i32, i32
  }
  func.func @transform_10(%arg0: i32) -> (i32, i32, i32) {
    %c0_i32 = arith.constant 0 : i32
    %c0_i32_0 = arith.constant 0 : i32
    %c0_i32_1 = arith.constant 0 : i32
    return %arg0, %c0_i32, %c0_i32_0 : i32, i32, i32
  }
}

</mosaic_0001>

<llo_original>
// kernel: tpu_custom_call.1
$region0: #{tpu_custom_call.1}
  #allocation0 [shape = 'u32[]', space=smem, size = 0x4, offset = 0x4, fixed_abs, tag = 'smem constant byte address 0x4 - core index']
  #allocation1 [shape = 'u32[144,128]{1,0:T(1,128)}', space=vmem, size = 0x12000, scoped, tag = 'internal scratch']
  #allocation2 [shape = 'f32[72,256]{1,0:T(8,128)}', space=vmem, size = 0x12000, scoped, tag = 'scratch operand']
  %s0 = inlined_call_operand.vmem [shape: f32[2,8,256], index: 0, kind: input, shape index: {}]
  %s1 = inlined_call_operand.hbm [shape: f32[8,72], index: 1, kind: input, shape index: {}]
  %s2 = inlined_call_operand.vmem [shape: f32[8,72], index: 2, kind: input, shape index: {}]
  %s3 = inlined_call_operand.vmem [shape: f32[9,1,256], index: 3, kind: input, shape index: {}]
  %s4 = inlined_call_operand.vmem [shape: f32[8,1], index: 4, kind: input, shape index: {}]
  %s5 = inlined_call_operand.vmem [shape: f32[8,1], index: 5, kind: input, shape index: {}]
  %s6 = inlined_call_operand.vmem [shape: f32[8,1], index: 6, kind: input, shape index: {}]
  %s7 = inlined_call_operand.vmem [shape: f32[8,1], index: 7, kind: input, shape index: {}]
  %s8 = inlined_call_operand.vmem [shape: f32[8,1], index: 8, kind: input, shape index: {}]
  %s9 = inlined_call_operand.vmem [shape: f32[8,1], index: 9, kind: input, shape index: {}]
  %s10 = inlined_call_operand.hbm [shape: f32[2,8,256], index: 10, kind: output, shape index: {}]
  %s11 = sld [smem:[#allocation0]]
  $region77: #{tpu_custom_call.1} parent=0
    _
  %s13 = ssub.s32 1, %s11
  %s14 = scalar_select 0, %s13, %s11
  $region1: #{tpu_custom_call.1} parent=0
    #allocation3 [shape = 'u8[4096]{0}', space=vmem, size = 0x1000, scoped, tag = 'input window, operand 1, single buffered']
    #allocation4 [shape = 's32[2]{0}', space=sflag, size = 0x8, scoped, tag = 'scoped memory for tpu_custom_call.1']
    #allocation5 [shape = 's32[2]{0}', space=sflag, size = 0x8, scoped, tag = 'scoped memory for tpu_custom_call.1']
    #allocation6 [shape = 'u8[16384]{0}', space=vmem, size = 0x4000, scoped, tag = 'output window, operand 0']
    %15 = vsyncpa [#allocation4], 0
    %16 = vsyncpa [#allocation5], 0
    %s17 = scalar_lea.sflag [#allocation5], 1
    %18 = vsyncpa %s17, 0
    loop: start=0, step=1, limit=4
    $region2: #{tpu_custom_call.1} parent=1 // loop_pre_header
      _
    $region3: #{tpu_custom_call.1} parent=1 // loop_header
      %s20 = sphi 0, %s24
      %p21 = scmp.ge.s32.totalorder %s20, 4
      %s30 = sphi 0, %s32
      %s33 = sphi 0, %s30
      %s34 = sphi 0, %s33
      %s50 = sphi 0, %s34
      %s54 = sphi 0, %s54
      %s56 = sphi 0, %s54
      %s57 = sphi 0, %s56
      %s71 = sphi 0, %s57
      %s75 = sphi 0, %s75
      %s77 = sphi 0, %s75
      %s78 = sphi 0, %s77
      %s92 = sphi 0, %s78
      %s96 = sphi 0, %s96
      %s98 = sphi 0, %s96
      %s99 = sphi 0, %s98
      %s113 = sphi 0, %s99
      %s117 = sphi 0, %s117
      %s119 = sphi 0, %s117
      %s120 = sphi 0, %s119
      %s134 = sphi 0, %s120
      %s138 = sphi 0, %s138
      %s140 = sphi 0, %s138
      %s141 = sphi 0, %s140
      %s155 = sphi 0, %s141
      %s159 = sphi 0, %s159
      %s161 = sphi 0, %s159
      %s162 = sphi 0, %s161
      %s176 = sphi 0, %s162
      %s180 = sphi 0, %s180
      %s182 = sphi 0, %s180
      %s183 = sphi 0, %s182
      %s197 = sphi 0, %s183
      %s201 = sphi 0, %s201
      %s203 = sphi 0, %s201
      %s204 = sphi 0, %s203
      %s218 = sphi 0, %s204
      %s222 = sphi 0, %s222
      %s224 = sphi 0, %s222
      %s225 = sphi 0, %s224
      %s239 = sphi 0, %s225
      %s245 = sphi 0, %s247
      %s248 = sphi 0, %s245
      %s249 = sphi 0, %s248
      %s265 = sphi 0, %s249
    $region4: #{tpu_custom_call.1} parent=1 // loop_header_branch
      %23 = sbr.rel (%p21) target = $region8
    $region5: #{tpu_custom_call.1} parent=1 // loop_body
      %s25 = ssub.s32 %s20, 1
      %s26 = ssub.s32 %s20, 2
      %s27 = sadd.s32 %s20, 1
      %s28 = ssub.s32 %s20, %s27
      %p29 = scmp.eq.s32.totalorder %s28, 0
      %s31 = sadd.s32 %s30, 1
      %s32 = scalar_select %p29, %s30, %s31
      %p35 = pneg %p29
      %p36 = scmp.eq.s32.totalorder %s20, 1
      %p37 = por %p35, %p36
      %p38 = scmp.ne.s32.totalorder %s30, %s33
      %p39 = scmp.eq.s32.totalorder %s20, 0
      %p40 = por %p38, %p39
      %p41 = scmp.ne.s32.totalorder %s30, %s33
      %p42 = scmp.eq.s32.totalorder %s25, 1
      %p43 = por %p41, %p42
      %p44 = scmp.ne.s32.totalorder %s33, %s34
      %p45 = scmp.eq.s32.totalorder %s25, 0
      %p46 = por %p44, %p45
      %p47 = scmp.ne.s32.totalorder %s33, %s34
      %p48 = scmp.eq.s32.totalorder %s26, 1
      %p49 = por %p47, %p48
      %p51 = scmp.ne.s32.totalorder %s34, %s50
      %p52 = scmp.eq.s32.totalorder %s26, 0
      %p53 = por %p51, %p52
      %s55 = sadd.s32 %s54, 1
      %p58 = scmp.eq.s32.totalorder %s20, 1
      %p59 = scmp.ne.s32.totalorder %s54, %s56
      %p60 = scmp.eq.s32.totalorder %s20, 0
      %p61 = por %p59, %p60
      %p62 = scmp.ne.s32.totalorder %s54, %s56
      %p63 = scmp.eq.s32.totalorder %s25, 1
      %p64 = por %p62, %p63
      %p65 = scmp.ne.s32.totalorder %s56, %s57
      %p66 = scmp.eq.s32.totalorder %s25, 0
      %p67 = por %p65, %p66
      %p68 = scmp.ne.s32.totalorder %s56, %s57
      %p69 = scmp.eq.s32.totalorder %s26, 1
      %p70 = por %p68, %p69
      %p72 = scmp.ne.s32.totalorder %s57, %s71
      %p73 = scmp.eq.s32.totalorder %s26, 0
      %p74 = por %p72, %p73
      %s76 = sadd.s32 %s75, 1
      %p79 = scmp.eq.s32.totalorder %s20, 1
      %p80 = scmp.ne.s32.totalorder %s75, %s77
      %p81 = scmp.eq.s32.totalorder %s20, 0
      %p82 = por %p80, %p81
      %p83 = scmp.ne.s32.totalorder %s75, %s77
      %p84 = scmp.eq.s32.totalorder %s25, 1
      %p85 = por %p83, %p84
      %p86 = scmp.ne.s32.totalorder %s77, %s78
      %p87 = scmp.eq.s32.totalorder %s25, 0
      %p88 = por %p86, %p87
      %p89 = scmp.ne.s32.totalorder %s77, %s78
      %p90 = scmp.eq.s32.totalorder %s26, 1
      %p91 = por %p89, %p90
      %p93 = scmp.ne.s32.totalorder %s78, %s92
      %p94 = scmp.eq.s32.totalorder %s26, 0
      %p95 = por %p93, %p94
      %s97 = sadd.s32 %s96, 1
      %p100 = scmp.eq.s32.totalorder %s20, 1
      %p101 = scmp.ne.s32.totalorder %s96, %s98
      %p102 = scmp.eq.s32.totalorder %s20, 0
      %p103 = por %p101, %p102
      %p104 = scmp.ne.s32.totalorder %s96, %s98
      %p105 = scmp.eq.s32.totalorder %s25, 1
      %p106 = por %p104, %p105
      %p107 = scmp.ne.s32.totalorder %s98, %s99
      %p108 = scmp.eq.s32.totalorder %s25, 0
      %p109 = por %p107, %p108
      %p110 = scmp.ne.s32.totalorder %s98, %s99
      %p111 = scmp.eq.s32.totalorder %s26, 1
      %p112 = por %p110, %p111
      %p114 = scmp.ne.s32.totalorder %s99, %s113
      %p115 = scmp.eq.s32.totalorder %s26, 0
      %p116 = por %p114, %p115
      %s118 = sadd.s32 %s117, 1
      %p121 = scmp.eq.s32.totalorder %s20, 1
      %p122 = scmp.ne.s32.totalorder %s117, %s119
      %p123 = scmp.eq.s32.totalorder %s20, 0
      %p124 = por %p122, %p123
      %p125 = scmp.ne.s32.totalorder %s117, %s119
      %p126 = scmp.eq.s32.totalorder %s25, 1
      %p127 = por %p125, %p126
      %p128 = scmp.ne.s32.totalorder %s119, %s120
      %p129 = scmp.eq.s32.totalorder %s25, 0
      %p130 = por %p128, %p129
      %p131 = scmp.ne.s32.totalorder %s119, %s120
      %p132 = scmp.eq.s32.totalorder %s26, 1
      %p133 = por %p131, %p132
      %p135 = scmp.ne.s32.totalorder %s120, %s134
      %p136 = scmp.eq.s32.totalorder %s26, 0
      %p137 = por %p135, %p136
      %s139 = sadd.s32 %s138, 1
      %p142 = scmp.eq.s32.totalorder %s20, 1
      %p143 = scmp.ne.s32.totalorder %s138, %s140
      %p144 = scmp.eq.s32.totalorder %s20, 0
      %p145 = por %p143, %p144
      %p146 = scmp.ne.s32.totalorder %s138, %s140
      %p147 = scmp.eq.s32.totalorder %s25, 1
      %p148 = por %p146, %p147
      %p149 = scmp.ne.s32.totalorder %s140, %s141
      %p150 = scmp.eq.s32.totalorder %s25, 0
      %p151 = por %p149, %p150
      %p152 = scmp.ne.s32.totalorder %s140, %s141
      %p153 = scmp.eq.s32.totalorder %s26, 1
      %p154 = por %p152, %p153
      %p156 = scmp.ne.s32.totalorder %s141, %s155
      %p157 = scmp.eq.s32.totalorder %s26, 0
      %p158 = por %p156, %p157
      %s160 = sadd.s32 %s159, 1
      %p163 = scmp.eq.s32.totalorder %s20, 1
      %p164 = scmp.ne.s32.totalorder %s159, %s161
      %p165 = scmp.eq.s32.totalorder %s20, 0
      %p166 = por %p164, %p165
      %p167 = scmp.ne.s32.totalorder %s159, %s161
      %p168 = scmp.eq.s32.totalorder %s25, 1
      %p169 = por %p167, %p168
      %p170 = scmp.ne.s32.totalorder %s161, %s162
      %p171 = scmp.eq.s32.totalorder %s25, 0
      %p172 = por %p170, %p171
      %p173 = scmp.ne.s32.totalorder %s161, %s162
      %p174 = scmp.eq.s32.totalorder %s26, 1
      %p175 = por %p173, %p174
      %p177 = scmp.ne.s32.totalorder %s162, %s176
      %p178 = scmp.eq.s32.totalorder %s26, 0
      %p179 = por %p177, %p178
      %s181 = sadd.s32 %s180, 1
      %p184 = scmp.eq.s32.totalorder %s20, 1
      %p185 = scmp.ne.s32.totalorder %s180, %s182
      %p186 = scmp.eq.s32.totalorder %s20, 0
      %p187 = por %p185, %p186
      %p188 = scmp.ne.s32.totalorder %s180, %s182
      %p189 = scmp.eq.s32.totalorder %s25, 1
      %p190 = por %p188, %p189
      %p191 = scmp.ne.s32.totalorder %s182, %s183
      %p192 = scmp.eq.s32.totalorder %s25, 0
      %p193 = por %p191, %p192
      %p194 = scmp.ne.s32.totalorder %s182, %s183
      %p195 = scmp.eq.s32.totalorder %s26, 1
      %p196 = por %p194, %p195
      %p198 = scmp.ne.s32.totalorder %s183, %s197
      %p199 = scmp.eq.s32.totalorder %s26, 0
      %p200 = por %p198, %p199
      %s202 = sadd.s32 %s201, 1
      %p205 = scmp.eq.s32.totalorder %s20, 1
      %p206 = scmp.ne.s32.totalorder %s201, %s203
      %p207 = scmp.eq.s32.totalorder %s20, 0
      %p208 = por %p206, %p207
      %p209 = scmp.ne.s32.totalorder %s201, %s203
      %p210 = scmp.eq.s32.totalorder %s25, 1
      %p211 = por %p209, %p210
      %p212 = scmp.ne.s32.totalorder %s203, %s204
      %p213 = scmp.eq.s32.totalorder %s25, 0
      %p214 = por %p212, %p213
      %p215 = scmp.ne.s32.totalorder %s203, %s204
      %p216 = scmp.eq.s32.totalorder %s26, 1
      %p217 = por %p215, %p216
      %p219 = scmp.ne.s32.totalorder %s204, %s218
      %p220 = scmp.eq.s32.totalorder %s26, 0
      %p221 = por %p219, %p220
      %s223 = sadd.s32 %s222, 1
      %p226 = scmp.eq.s32.totalorder %s20, 1
      %p227 = scmp.ne.s32.totalorder %s222, %s224
      %p228 = scmp.eq.s32.totalorder %s20, 0
      %p229 = por %p227, %p228
      %p230 = scmp.ne.s32.totalorder %s222, %s224
      %p231 = scmp.eq.s32.totalorder %s25, 1
      %p232 = por %p230, %p231
      %p233 = scmp.ne.s32.totalorder %s224, %s225
      %p234 = scmp.eq.s32.totalorder %s25, 0
      %p235 = por %p233, %p234
      %p236 = scmp.ne.s32.totalorder %s224, %s225
      %p237 = scmp.eq.s32.totalorder %s26, 1
      %p238 = por %p236, %p237
      %p240 = scmp.ne.s32.totalorder %s225, %s239
      %p241 = scmp.eq.s32.totalorder %s26, 0
      %p242 = por %p240, %p241
      %s243 = ssub.s32 %s20, %s27
      %p244 = scmp.eq.s32.totalorder %s243, 0
      %s246 = sadd.s32 %s245, 1
      %s247 = scalar_select %p244, %s245, %s246
      %p250 = pneg %p244
      %p251 = scmp.eq.s32.totalorder %s20, 1
      %p252 = por %p250, %p251
      %p253 = scmp.ne.s32.totalorder %s245, %s248
      %p254 = scmp.eq.s32.totalorder %s20, 0
      %p255 = por %p253, %p254
      %p256 = scmp.ne.s32.totalorder %s245, %s248
      %p257 = scmp.eq.s32.totalorder %s25, 1
      %p258 = por %p256, %p257
      %p259 = scmp.ne.s32.totalorder %s248, %s249
      %p260 = scmp.eq.s32.totalorder %s25, 0
      %p261 = por %p259, %p260
      %p262 = scmp.ne.s32.totalorder %s248, %s249
      %p263 = scmp.eq.s32.totalorder %s26, 1
      %p264 = por %p262, %p263
      %p266 = scmp.ne.s32.totalorder %s249, %s265
      %p267 = scmp.eq.s32.totalorder %s26, 0
      %p268 = por %p266, %p267
      %p269 = scmp.le.s32.totalorder 1, %s20
      %p270 = scmp.lt.s32.totalorder %s20, 3
      %p271 = pnand %p269, %p270
      %p272 = pneg %p271
      // Predicated region
      $region9: #{tpu_custom_call.1} parent=5 // pred_check
        _
      $region10: #{tpu_custom_call.1} parent=5 // pred_check_branch
        %274 = sbr.rel (%p271) target = $region12
      $region11: #{tpu_custom_call.1} parent=5 // pred_region
        %s275 = ssub.s32 %s20, 1
        // Predicated region
        $region13: #{tpu_custom_call.1} parent=11 // pred_check
          %p276 = pneg %p67
        $region14: #{tpu_custom_call.1} parent=11 // pred_check_branch
          %278 = sbr.rel (%p276) target = $region16
        $region15: #{tpu_custom_call.1} parent=11 // pred_region
          %s280 = ssub.s32 128, 128
          %281 = vsyncadd [#allocation4], %s280
          %s283 = sshll.u32 [#allocation3], 4
          %s284 = int_to_ptr.vmem [resolvable:$true] %s283
          %286 = dma.hbm_to_vmem [thread:$0]  %s1, 128, %s284, [#allocation4]
        $region16: #{tpu_custom_call.1} parent=11 // pred_fallthru
          _
        // Predicated region
        $region17: #{tpu_custom_call.1} parent=11 // pred_check
          %p287 = pneg %p88
        $region18: #{tpu_custom_call.1} parent=11 // pred_check_branch
          %289 = sbr.rel (%p287) target = $region20
        $region19: #{tpu_custom_call.1} parent=11 // pred_region
          _
        $region20: #{tpu_custom_call.1} parent=11 // pred_fallthru
          _
        // Predicated region
        $region21: #{tpu_custom_call.1} parent=11 // pred_check
          %p290 = pneg %p109
        $region22: #{tpu_custom_call.1} parent=11 // pred_check_branch
          %292 = sbr.rel (%p290) target = $region24
        $region23: #{tpu_custom_call.1} parent=11 // pred_region
          _
        $region24: #{tpu_custom_call.1} parent=11 // pred_fallthru
          _
        // Predicated region
        $region25: #{tpu_custom_call.1} parent=11 // pred_check
          %p293 = pneg %p130
        $region26: #{tpu_custom_call.1} parent=11 // pred_check_branch
          %295 = sbr.rel (%p293) target = $region28
        $region27: #{tpu_custom_call.1} parent=11 // pred_region
          _
        $region28: #{tpu_custom_call.1} parent=11 // pred_fallthru
          _
        // Predicated region
        $region29: #{tpu_custom_call.1} parent=11 // pred_check
          %p296 = pneg %p151
        $region30: #{tpu_custom_call.1} parent=11 // pred_check_branch
          %298 = sbr.rel (%p296) target = $region32
        $region31: #{tpu_custom_call.1} parent=11 // pred_region
          _
        $region32: #{tpu_custom_call.1} parent=11 // pred_fallthru
          _
        // Predicated region
        $region33: #{tpu_custom_call.1} parent=11 // pred_check
          %p299 = pneg %p172
        $region34: #{tpu_custom_call.1} parent=11 // pred_check_branch
          %301 = sbr.rel (%p299) target = $region36
        $region35: #{tpu_custom_call.1} parent=11 // pred_region
          _
        $region36: #{tpu_custom_call.1} parent=11 // pred_fallthru
          _
        // Predicated region
        $region37: #{tpu_custom_call.1} parent=11 // pred_check
          %p302 = pneg %p193
        $region38: #{tpu_custom_call.1} parent=11 // pred_check_branch
          %304 = sbr.rel (%p302) target = $region40
        $region39: #{tpu_custom_call.1} parent=11 // pred_region
          _
        $region40: #{tpu_custom_call.1} parent=11 // pred_fallthru
          _
        // Predicated region
        $region41: #{tpu_custom_call.1} parent=11 // pred_check
          %p305 = pneg %p214
        $region42: #{tpu_custom_call.1} parent=11 // pred_check_branch
          %307 = sbr.rel (%p305) target = $region44
        $region43: #{tpu_custom_call.1} parent=11 // pred_region
          _
        $region44: #{tpu_custom_call.1} parent=11 // pred_fallthru
          _
        // Predicated region
        $region45: #{tpu_custom_call.1} parent=11 // pred_check
          %p308 = pneg %p235
        $region46: #{tpu_custom_call.1} parent=11 // pred_check_branch
          %310 = sbr.rel (%p308) target = $region48
        $region47: #{tpu_custom_call.1} parent=11 // pred_region
          _
        $region48: #{tpu_custom_call.1} parent=11 // pred_fallthru
          _
      $region12: #{tpu_custom_call.1} parent=5 // pred_fallthru
        _
      %p311 = scmp.lt.s32.totalorder %s20, 2
      // Predicated region
      $region49: #{tpu_custom_call.1} parent=5 // pred_check
        %p312 = pneg %p311
      $region50: #{tpu_custom_call.1} parent=5 // pred_check_branch
        %314 = sbr.rel (%p312) target = $region52
      $region51: #{tpu_custom_call.1} parent=5 // pred_region
        // Predicated region
        $region53: #{tpu_custom_call.1} parent=51 // pred_check
          %p315 = pneg %p40
        $region54: #{tpu_custom_call.1} parent=51 // pred_check_branch
          %317 = sbr.rel (%p315) target = $region56
        $region55: #{tpu_custom_call.1} parent=51 // pred_region
          %p318 = scmp.lt.s32.totalorder %s20, 1
          %s319 = scalar_select %p318, %s20, 1
          %s320 = smul.addr %s319, 2
          %s321 = smul.addr %s320, 8
          %s322 = scalar_lea.vmem %s0, %s321
        $region56: #{tpu_custom_call.1} parent=51 // pred_fallthru
          _
      $region52: #{tpu_custom_call.1} parent=5 // pred_fallthru
        _
      %p323 = scmp.le.s32.totalorder 1, %s20
      %p324 = scmp.lt.s32.totalorder %s20, 3
      %p325 = pnand %p323, %p324
      %p326 = pneg %p325
      // Predicated region
      $region57: #{tpu_custom_call.1} parent=5 // pred_check
        _
      $region58: #{tpu_custom_call.1} parent=5 // pred_check_branch
        %328 = sbr.rel (%p325) target = $region60
      $region59: #{tpu_custom_call.1} parent=5 // pred_region
        %s329 = ssub.s32 %s20, 1
        // Predicated region
        $region61: #{tpu_custom_call.1} parent=59 // pred_check
          %p330 = pneg %p67
        $region62: #{tpu_custom_call.1} parent=59 // pred_check_branch
          %332 = sbr.rel (%p330) target = $region64
        $region63: #{tpu_custom_call.1} parent=59 // pred_region
          %333 = dma.done [#allocation4], 128
        $region64: #{tpu_custom_call.1} parent=59 // pred_fallthru
          _
        %p334 = scmp.lt.s32.totalorder %s25, 1
        %s335 = scalar_select %p334, %s25, 1
        %s336 = smul.addr %s335, 2
        %s337 = smul.addr %s336, 8
        %s338 = scalar_lea.vmem %s0, %s337
        %p339 = pneg %p46
        %p340 = pneg %p43
        %p341 = pneg %p67
        %p342 = pneg %p64
        %p343 = pneg %p88
        %p344 = pneg %p85
        %p345 = pneg %p109
        %p346 = pneg %p106
        %p347 = pneg %p130
        %p348 = pneg %p127
        %p349 = pneg %p151
        %p350 = pneg %p148
        %p351 = pneg %p172
        %p352 = pneg %p169
        %p353 = pneg %p193
        %p354 = pneg %p190
        %p355 = pneg %p214
        %p356 = pneg %p211
        %p357 = pneg %p235
        %p358 = pneg %p232
        %p359 = pneg %p261
        %p360 = pneg %p258
        %s361 = sand.u32 %s248, 1
        %s362 = scalar_lea.sflag [#allocation5], %s361
        %s363 = sand.u32 %s248, 1
        %s364 = smul.addr %s363, 16
        %s365 = scalar_lea.vmem [#allocation6], %s364
        %p366 = scmp.lt.s32.totalorder %s25, 1
        %s367 = scalar_select %p366, %s25, 1
        %s368 = smul.addr %s367, 2
        %s369 = smul.addr %s368, 8
        %s370 = scalar_lea.vmem %s0, %s369
        %v371 = vld [vmem:[%s370] sm:$0xff]
        %v372 = vld [vmem:[%s370 + $0x8] sm:$0xff]
        %v373 = vld [vmem:[%s4] sm:$0xff]
        %375 = vset.pattern.permute.xlu0 0
        %376 = vperm.xlu0 %375, %v373
        %v377 = vpop.permute.xlu0 %376
        %v379 = vmul.f32 %v371, %v377
        %v380 = vmul.f32 %v372, %v377
        %v381 = vld [vmem:[%s5] sm:$0xff]
        %383 = vset.pattern.permute.xlu0 0
        %384 = vperm.xlu0 %383, %v381
        %v385 = vpop.permute.xlu0 %384
        %v387 = vadd.f32 %v379, %v385
        %v388 = vadd.f32 %v380, %v385
        %389 = vrot.lane.b32.xlu0 %v387, 17
        %v390 = vpop.permute.xlu0 %389
        %391 = vrot.lane.b32.xlu0 %v388, 17
        %v392 = vpop.permute.xlu0 %391
        %v393 = vlaneseq
        %v394 = vand.u32 %v393, 127
        %vm395 = vcmp.lt.s32.totalorder %v394, 17
        %v396 = vsel %vm395, %v390, %v392
        %v397 = vsel %vm395, %v392, %v390
        %v398 = vld [vmem:[%s3] sm:$0x3]
        %v400 = vlaneseq
        %v401 = vshrl.u32 %v400, 7
        %v402 = vsub.s32 0, %v401
        %v403 = vrot.slane %v398, %v402
        %v404 = vlaneseq
        %v405 = vshrl.u32 %v404, 7
        %v406 = vsub.s32 1, %v405
        %v407 = vrot.slane %v398, %v406
        %v410 = vmul.f32 %v397, %v403
        %v411 = vmul.f32 %v396, %v407
        %412 = vst [vmem:[#allocation2] sm:$0xff] %v410
        %413 = vst [vmem:[#allocation2 + $0x8] sm:$0xff] %v411
        %414 = vrot.lane.b32.xlu0 %v387, 16
        %v415 = vpop.permute.xlu0 %414
        %416 = vrot.lane.b32.xlu0 %v388, 16
        %v417 = vpop.permute.xlu0 %416
        %vm418 = vcmp.lt.s32.totalorder %v394, 16
        %v419 = vsel %vm418, %v415, %v417
        %v420 = vsel %vm418, %v417, %v415
        %s421 = scalar_lea.vmem %s3, 2
        %v422 = vld [vmem:[%s421] sm:$0x3]
        %v424 = vlaneseq
        %v425 = vshrl.u32 %v424, 7
        %v426 = vsub.s32 0, %v425
        %v427 = vrot.slane %v422, %v426
        %v428 = vlaneseq
        %v429 = vshrl.u32 %v428, 7
        %v430 = vsub.s32 1, %v429
        %v431 = vrot.slane %v422, %v430
        %v434 = vmul.f32 %v420, %v427
        %v435 = vmul.f32 %v419, %v431
        %436 = vst [vmem:[#allocation2 + $0x10] sm:$0xff] %v434
        %437 = vst [vmem:[#allocation2 + $0x18] sm:$0xff] %v435
        %438 = vrot.lane.b32.xlu0 %v387, 15
        %v439 = vpop.permute.xlu0 %438
        %440 = vrot.lane.b32.xlu0 %v388, 15
        %v441 = vpop.permute.xlu0 %440
        %vm442 = vcmp.lt.s32.totalorder %v394, 15
        %v443 = vsel %vm442, %v439, %v441
        %v444 = vsel %vm442, %v441, %v439
        %s445 = scalar_lea.vmem %s3, 4
        %v446 = vld [vmem:[%s445] sm:$0x3]
        %v448 = vlaneseq
        %v449 = vshrl.u32 %v448, 7
        %v450 = vsub.s32 0, %v449
        %v451 = vrot.slane %v446, %v450
        %v452 = vlaneseq
        %v453 = vshrl.u32 %v452, 7
        %v454 = vsub.s32 1, %v453
        %v455 = vrot.slane %v446, %v454
        %v458 = vmul.f32 %v444, %v451
        %v459 = vmul.f32 %v443, %v455
        %460 = vst [vmem:[#allocation2 + $0x20] sm:$0xff] %v458
        %461 = vst [vmem:[#allocation2 + $0x28] sm:$0xff] %v459
        %462 = vrot.lane.b32.xlu0 %v387, 1
        %v463 = vpop.permute.xlu0 %462
        %464 = vrot.lane.b32.xlu0 %v388, 1
        %v465 = vpop.permute.xlu0 %464
        %vm466 = vcmp.lt.s32.totalorder %v394, 1
        %v467 = vsel %vm466, %v463, %v465
        %v468 = vsel %vm466, %v465, %v463
        %s469 = scalar_lea.vmem %s3, 6
        %v470 = vld [vmem:[%s469] sm:$0x3]
        %v472 = vlaneseq
        %v473 = vshrl.u32 %v472, 7
        %v474 = vsub.s32 0, %v473
        %v475 = vrot.slane %v470, %v474
        %v476 = vlaneseq
        %v477 = vshrl.u32 %v476, 7
        %v478 = vsub.s32 1, %v477
        %v479 = vrot.slane %v470, %v478
        %v482 = vmul.f32 %v468, %v475
        %v483 = vmul.f32 %v467, %v479
        %484 = vst [vmem:[#allocation2 + $0x30] sm:$0xff] %v482
        %485 = vst [vmem:[#allocation2 + $0x38] sm:$0xff] %v483
        %s486 = scalar_lea.vmem %s3, 8
        %v487 = vld [vmem:[%s486] sm:$0x3]
        %v489 = vlaneseq
        %v490 = vshrl.u32 %v489, 7
        %v491 = vsub.s32 0, %v490
        %v492 = vrot.slane %v487, %v491
        %v493 = vlaneseq
        %v494 = vshrl.u32 %v493, 7
        %v495 = vsub.s32 1, %v494
        %v496 = vrot.slane %v487, %v495
        %v499 = vmul.f32 %v387, %v492
        %v500 = vmul.f32 %v388, %v496
        %501 = vst [vmem:[#allocation2 + $0x40] sm:$0xff] %v499
        %502 = vst [vmem:[#allocation2 + $0x48] sm:$0xff] %v500
        %503 = vrot.lane.b32.xlu0 %v387, 127
        %v504 = vpop.permute.xlu0 %503
        %505 = vrot.lane.b32.xlu0 %v388, 127
        %v506 = vpop.permute.xlu0 %505
        %vm507 = vcmp.lt.s32.totalorder %v394, 127
        %v508 = vsel %vm507, %v504, %v506
        %v509 = vsel %vm507, %v506, %v504
        %s510 = scalar_lea.vmem %s3, 10
        %v511 = vld [vmem:[%s510] sm:$0x3]
        %v513 = vlaneseq
        %v514 = vshrl.u32 %v513, 7
        %v515 = vsub.s32 0, %v514
        %v516 = vrot.slane %v511, %v515
        %v517 = vlaneseq
        %v518 = vshrl.u32 %v517, 7
        %v519 = vsub.s32 1, %v518
        %v520 = vrot.slane %v511, %v519
        %v523 = vmul.f32 %v508, %v516
        %v524 = vmul.f32 %v509, %v520
        %525 = vst [vmem:[#allocation2 + $0x50] sm:$0xff] %v523
        %526 = vst [vmem:[#allocation2 + $0x58] sm:$0xff] %v524
        %527 = vrot.lane.b32.xlu0 %v387, 113
        %v528 = vpop.permute.xlu0 %527
        %529 = vrot.lane.b32.xlu0 %v388, 113
        %v530 = vpop.permute.xlu0 %529
        %vm531 = vcmp.lt.s32.totalorder %v394, 113
        %v532 = vsel %vm531, %v528, %v530
        %v533 = vsel %vm531, %v530, %v528
        %s534 = scalar_lea.vmem %s3, 12
        %v535 = vld [vmem:[%s534] sm:$0x3]
        %v537 = vlaneseq
        %v538 = vshrl.u32 %v537, 7
        %v539 = vsub.s32 0, %v538
        %v540 = vrot.slane %v535, %v539
        %v541 = vlaneseq
        %v542 = vshrl.u32 %v541, 7
        %v543 = vsub.s32 1, %v542
        %v544 = vrot.slane %v535, %v543
        %v547 = vmul.f32 %v532, %v540
        %v548 = vmul.f32 %v533, %v544
        %549 = vst [vmem:[#allocation2 + $0x60] sm:$0xff] %v547
        %550 = vst [vmem:[#allocation2 + $0x68] sm:$0xff] %v548
        %551 = vrot.lane.b32.xlu0 %v387, 112
        %v552 = vpop.permute.xlu0 %551
        %553 = vrot.lane.b32.xlu0 %v388, 112
        %v554 = vpop.permute.xlu0 %553
        %vm555 = vcmp.lt.s32.totalorder %v394, 112
        %v556 = vsel %vm555, %v552, %v554
        %v557 = vsel %vm555, %v554, %v552
        %s558 = scalar_lea.vmem %s3, 14
        %v559 = vld [vmem:[%s558] sm:$0x3]
        %v561 = vlaneseq
        %v562 = vshrl.u32 %v561, 7
        %v563 = vsub.s32 0, %v562
        %v564 = vrot.slane %v559, %v563
        %v565 = vlaneseq
        %v566 = vshrl.u32 %v565, 7
        %v567 = vsub.s32 1, %v566
        %v568 = vrot.slane %v559, %v567
        %v571 = vmul.f32 %v556, %v564
        %v572 = vmul.f32 %v557, %v568
        %573 = vst [vmem:[#allocation2 + $0x70] sm:$0xff] %v571
        %574 = vst [vmem:[#allocation2 + $0x78] sm:$0xff] %v572
        %575 = vrot.lane.b32.xlu0 %v387, 111
        %v576 = vpop.permute.xlu0 %575
        %577 = vrot.lane.b32.xlu0 %v388, 111
        %v578 = vpop.permute.xlu0 %577
        %vm579 = vcmp.lt.s32.totalorder %v394, 111
        %v580 = vsel %vm579, %v576, %v578
        %v581 = vsel %vm579, %v578, %v576
        %s582 = scalar_lea.vmem %s3, 16
        %v583 = vld [vmem:[%s582] sm:$0x3]
        %v585 = vlaneseq
        %v586 = vshrl.u32 %v585, 7
        %v587 = vsub.s32 0, %v586
        %v588 = vrot.slane %v583, %v587
        %v589 = vlaneseq
        %v590 = vshrl.u32 %v589, 7
        %v591 = vsub.s32 1, %v590
        %v592 = vrot.slane %v583, %v591
        %v595 = vmul.f32 %v580, %v588
        %v596 = vmul.f32 %v581, %v592
        %597 = vst [vmem:[#allocation2 + $0x80] sm:$0xff] %v595
        %598 = vst [vmem:[#allocation2 + $0x88] sm:$0xff] %v596
        %v599 = vld [vmem:[#allocation3] sm:$0xff]
        %v600 = vld [vmem:[#allocation2] sm:$0xff]
        %v601 = vld [vmem:[#allocation2 + $0x8] sm:$0xff]
        %v602 = vld [vmem:[#allocation2 + $0x10] sm:$0xff]
        %v603 = vld [vmem:[#allocation2 + $0x18] sm:$0xff]
        %v604 = vld [vmem:[#allocation2 + $0x20] sm:$0xff]
        %v605 = vld [vmem:[#allocation2 + $0x28] sm:$0xff]
        %v606 = vld [vmem:[#allocation2 + $0x30] sm:$0xff]
        %v607 = vld [vmem:[#allocation2 + $0x38] sm:$0xff]
        %v608 = vld [vmem:[#allocation2 + $0x40] sm:$0xff]
        %v609 = vld [vmem:[#allocation2 + $0x48] sm:$0xff]
        %v610 = vld [vmem:[#allocation2 + $0x50] sm:$0xff]
        %v611 = vld [vmem:[#allocation2 + $0x58] sm:$0xff]
        %v612 = vld [vmem:[#allocation2 + $0x60] sm:$0xff]
        %v613 = vld [vmem:[#allocation2 + $0x68] sm:$0xff]
        %v614 = vld [vmem:[#allocation2 + $0x70] sm:$0xff]
        %v615 = vld [vmem:[#allocation2 + $0x78] sm:$0xff]
        %v616 = vld [vmem:[#allocation2 + $0x80] sm:$0xff]
        %v617 = vld [vmem:[#allocation2 + $0x88] sm:$0xff]
        %vm618 = vcmask 588800
        %v620 = vsel %vm618, %v599, 0
        %622 = vmatprep.subr.mxu0 %v601
        %623 = vmatpush1.msra.mxu0 %v600
        %624 = vmatprep.subr.mxu0 %v603
        %625 = vmatpush1.msra.mxu0 %v602
        %626 = vmatprep.subr.mxu0 %v605
        %627 = vmatpush1.msra.mxu0 %v604
        %628 = vmatprep.subr.mxu0 %v607
        %629 = vmatpush1.msra.mxu0 %v606
        %630 = vmatprep.subr.mxu0 %v609
        %631 = vmatpush1.msra.mxu0 %v608
        %632 = vmatprep.subr.mxu0 %v611
        %633 = vmatpush1.msra.mxu0 %v610
        %634 = vmatprep.subr.mxu0 %v613
        %635 = vmatpush1.msra.mxu0 %v612
        %636 = vmatprep.subr.mxu0 %v615
        %637 = vmatpush1.msra.mxu0 %v614
        %638 = vmatprep.subr.mxu0 %v617
        %639 = vmatpush1.msra.mxu0 %v616
        %640 = vmatprep.subr.mxu0 0.0
        %641 = vmatpush1.msra.mxu0 0.0
        %642 = vmatprep.subr.mxu0 0.0
        %643 = vmatpush1.msra.mxu0 0.0
        %644 = vmatprep.subr.mxu0 0.0
        %645 = vmatpush1.msra.mxu0 0.0
        %646 = vmatprep.subr.mxu0 0.0
        %647 = vmatpush1.msra.mxu0 0.0
        %648 = vmatprep.subr.mxu0 0.0
        %649 = vmatpush1.msra.mxu0 0.0
        %650 = vmatprep.subr.mxu0 0.0
        %651 = vmatpush1.msra.mxu0 0.0
        %652 = vmatprep.subr.mxu0 0.0
        %653 = vmatpush1.msra.mxu0 0.0
        %654 = vmatprep.subr.mxu0 0.0
        %655 = vmatpush1.msra.mxu0 0.0
        %656 = vmatprep.subr.mxu0 0.0
        %657 = vmatpush1.msra.mxu0 0.0
        %658 = vmatprep.subr.mxu0 0.0
        %659 = vmatpush1.msra.mxu0 0.0
        %660 = vmatprep.subr.mxu0 0.0
        %661 = vmatpush1.msra.mxu0 0.0
        %662 = vmatprep.subr.mxu0 0.0
        %663 = vmatpush1.msra.mxu0 0.0
        %664 = vmatprep.subr.mxu0 0.0
        %665 = vmatpush1.msra.mxu0 0.0
        %666 = vmatprep.subr.mxu0 0.0
        %667 = vmatpush1.msra.mxu0 0.0
        %668 = vmatprep.subr.mxu0 0.0
        %669 = vmatpush1.msra.mxu0 0.0
        %670 = vmatprep.subr.mxu0 0.0
        %671 = vmatpush1.msra.mxu0 0.0
        %672 = vmatprep.subr.mxu0 0.0
        %673 = vmatpush1.msra.mxu0 0.0
        %674 = vmatprep.subr.mxu0 0.0
        %675 = vmatpush1.msra.mxu0 0.0
        %676 = vmatprep.subr.mxu0 0.0
        %677 = vmatpush1.msra.mxu0 0.0
        %678 = vmatprep.subr.mxu0 0.0
        %679 = vmatpush1.msra.mxu0 0.0
        %680 = vmatprep.subr.mxu0 0.0
        %681 = vmatpush1.msra.mxu0 0.0
        %682 = vmatprep.subr.mxu0 0.0
        %683 = vmatpush1.msra.mxu0 0.0
        %684 = vmatprep.subr.mxu0 0.0
        %685 = vmatpush1.msra.mxu0 0.0
        %686 = vmatprep.mubr.f32.mxu0 0.0
        %687 = vmatmul.mubr.f32.gmra.mrb[0].mxu0 %v620
        %v688 = vpop.f32.mrb[0].mxu0
        %v689 = vadd.f32 0.0, %v688
        %v690 = vpop.f32.mrb[0].mxu0
        %v691 = vadd.f32 0.0, %v690
        %692 = vdwg.mxu0
        %v693 = vld [vmem:[%s6] sm:$0xff]
        %695 = vset.pattern.permute.xlu0 0
        %696 = vperm.xlu0 %695, %v693
        %v697 = vpop.permute.xlu0 %696
        %v699 = vmul.f32 %v689, %v697
        %v700 = vmul.f32 %v691, %v697
        %v701 = vld [vmem:[%s7] sm:$0xff]
        %703 = vset.pattern.permute.xlu0 0
        %704 = vperm.xlu0 %703, %v701
        %v705 = vpop.permute.xlu0 %704
        %v707 = vadd.f32 %v699, %v705
        %v708 = vadd.f32 %v700, %v705
        %709 = vrot.lane.b32.xlu0 %v707, 17
        %v710 = vpop.permute.xlu0 %709
        %711 = vrot.lane.b32.xlu0 %v708, 17
        %v712 = vpop.permute.xlu0 %711
        %v713 = vsel %vm395, %v710, %v712
        %v714 = vsel %vm395, %v712, %v710
        %v715 = vld [vmem:[%s3] sm:$0x3]
        %v717 = vlaneseq
        %v718 = vshrl.u32 %v717, 7
        %v719 = vsub.s32 0, %v718
        %v720 = vrot.slane %v715, %v719
        %v721 = vlaneseq
        %v722 = vshrl.u32 %v721, 7
        %v723 = vsub.s32 1, %v722
        %v724 = vrot.slane %v715, %v723
        %v727 = vmul.f32 %v714, %v720
        %v728 = vmul.f32 %v713, %v724
        %729 = vst [vmem:[#allocation2] sm:$0xff] %v727
        %730 = vst [vmem:[#allocation2 + $0x8] sm:$0xff] %v728
        %731 = vrot.lane.b32.xlu0 %v707, 16
        %v732 = vpop.permute.xlu0 %731
        %733 = vrot.lane.b32.xlu0 %v708, 16
        %v734 = vpop.permute.xlu0 %733
        %v735 = vsel %vm418, %v732, %v734
        %v736 = vsel %vm418, %v734, %v732
        %v737 = vld [vmem:[%s421] sm:$0x3]
        %v739 = vlaneseq
        %v740 = vshrl.u32 %v739, 7
        %v741 = vsub.s32 0, %v740
        %v742 = vrot.slane %v737, %v741
        %v743 = vlaneseq
        %v744 = vshrl.u32 %v743, 7
        %v745 = vsub.s32 1, %v744
        %v746 = vrot.slane %v737, %v745
        %v749 = vmul.f32 %v736, %v742
        %v750 = vmul.f32 %v735, %v746
        %751 = vst [vmem:[#allocation2 + $0x10] sm:$0xff] %v749
        %752 = vst [vmem:[#allocation2 + $0x18] sm:$0xff] %v750
        %753 = vrot.lane.b32.xlu0 %v707, 15
        %v754 = vpop.permute.xlu0 %753
        %755 = vrot.lane.b32.xlu0 %v708, 15
        %v756 = vpop.permute.xlu0 %755
        %v757 = vsel %vm442, %v754, %v756
        %v758 = vsel %vm442, %v756, %v754
        %v759 = vld [vmem:[%s445] sm:$0x3]
        %v761 = vlaneseq
        %v762 = vshrl.u32 %v761, 7
        %v763 = vsub.s32 0, %v762
        %v764 = vrot.slane %v759, %v763
        %v765 = vlaneseq
        %v766 = vshrl.u32 %v765, 7
        %v767 = vsub.s32 1, %v766
        %v768 = vrot.slane %v759, %v767
        %v771 = vmul.f32 %v758, %v764
        %v772 = vmul.f32 %v757, %v768
        %773 = vst [vmem:[#allocation2 + $0x20] sm:$0xff] %v771
        %774 = vst [vmem:[#allocation2 + $0x28] sm:$0xff] %v772
        %775 = vrot.lane.b32.xlu0 %v707, 1
        %v776 = vpop.permute.xlu0 %775
        %777 = vrot.lane.b32.xlu0 %v708, 1
        %v778 = vpop.permute.xlu0 %777
        %v779 = vsel %vm466, %v776, %v778
        %v780 = vsel %vm466, %v778, %v776
        %v781 = vld [vmem:[%s469] sm:$0x3]
        %v783 = vlaneseq
        %v784 = vshrl.u32 %v783, 7
        %v785 = vsub.s32 0, %v784
        %v786 = vrot.slane %v781, %v785
        %v787 = vlaneseq
        %v788 = vshrl.u32 %v787, 7
        %v789 = vsub.s32 1, %v788
        %v790 = vrot.slane %v781, %v789
        %v793 = vmul.f32 %v780, %v786
        %v794 = vmul.f32 %v779, %v790
        %795 = vst [vmem:[#allocation2 + $0x30] sm:$0xff] %v793
        %796 = vst [vmem:[#allocation2 + $0x38] sm:$0xff] %v794
        %v797 = vld [vmem:[%s486] sm:$0x3]
        %v799 = vlaneseq
        %v800 = vshrl.u32 %v799, 7
        %v801 = vsub.s32 0, %v800
        %v802 = vrot.slane %v797, %v801
        %v803 = vlaneseq
        %v804 = vshrl.u32 %v803, 7
        %v805 = vsub.s32 1, %v804
        %v806 = vrot.slane %v797, %v805
        %v809 = vmul.f32 %v707, %v802
        %v810 = vmul.f32 %v708, %v806
        %811 = vst [vmem:[#allocation2 + $0x40] sm:$0xff] %v809
        %812 = vst [vmem:[#allocation2 + $0x48] sm:$0xff] %v810
        %813 = vrot.lane.b32.xlu0 %v707, 127
        %v814 = vpop.permute.xlu0 %813
        %815 = vrot.lane.b32.xlu0 %v708, 127
        %v816 = vpop.permute.xlu0 %815
        %v817 = vsel %vm507, %v814, %v816
        %v818 = vsel %vm507, %v816, %v814
        %v819 = vld [vmem:[%s510] sm:$0x3]
        %v821 = vlaneseq
        %v822 = vshrl.u32 %v821, 7
        %v823 = vsub.s32 0, %v822
        %v824 = vrot.slane %v819, %v823
        %v825 = vlaneseq
        %v826 = vshrl.u32 %v825, 7
        %v827 = vsub.s32 1, %v826
        %v828 = vrot.slane %v819, %v827
        %v831 = vmul.f32 %v817, %v824
        %v832 = vmul.f32 %v818, %v828
        %833 = vst [vmem:[#allocation2 + $0x50] sm:$0xff] %v831
        %834 = vst [vmem:[#allocation2 + $0x58] sm:$0xff] %v832
        %835 = vrot.lane.b32.xlu0 %v707, 113
        %v836 = vpop.permute.xlu0 %835
        %837 = vrot.lane.b32.xlu0 %v708, 113
        %v838 = vpop.permute.xlu0 %837
        %v839 = vsel %vm531, %v836, %v838
        %v840 = vsel %vm531, %v838, %v836
        %v841 = vld [vmem:[%s534] sm:$0x3]
        %v843 = vlaneseq
        %v844 = vshrl.u32 %v843, 7
        %v845 = vsub.s32 0, %v844
        %v846 = vrot.slane %v841, %v845
        %v847 = vlaneseq
        %v848 = vshrl.u32 %v847, 7
        %v849 = vsub.s32 1, %v848
        %v850 = vrot.slane %v841, %v849
        %v853 = vmul.f32 %v839, %v846
        %v854 = vmul.f32 %v840, %v850
        %855 = vst [vmem:[#allocation2 + $0x60] sm:$0xff] %v853
        %856 = vst [vmem:[#allocation2 + $0x68] sm:$0xff] %v854
        %857 = vrot.lane.b32.xlu0 %v707, 112
        %v858 = vpop.permute.xlu0 %857
        %859 = vrot.lane.b32.xlu0 %v708, 112
        %v860 = vpop.permute.xlu0 %859
        %v861 = vsel %vm555, %v858, %v860
        %v862 = vsel %vm555, %v860, %v858
        %v863 = vld [vmem:[%s558] sm:$0x3]
        %v865 = vlaneseq
        %v866 = vshrl.u32 %v865, 7
        %v867 = vsub.s32 0, %v866
        %v868 = vrot.slane %v863, %v867
        %v869 = vlaneseq
        %v870 = vshrl.u32 %v869, 7
        %v871 = vsub.s32 1, %v870
        %v872 = vrot.slane %v863, %v871
        %v875 = vmul.f32 %v861, %v868
        %v876 = vmul.f32 %v862, %v872
        %877 = vst [vmem:[#allocation2 + $0x70] sm:$0xff] %v875
        %878 = vst [vmem:[#allocation2 + $0x78] sm:$0xff] %v876
        %879 = vrot.lane.b32.xlu0 %v707, 111
        %v880 = vpop.permute.xlu0 %879
        %881 = vrot.lane.b32.xlu0 %v708, 111
        %v882 = vpop.permute.xlu0 %881
        %v883 = vsel %vm579, %v880, %v882
        %v884 = vsel %vm579, %v882, %v880
        %v885 = vld [vmem:[%s582] sm:$0x3]
        %v887 = vlaneseq
        %v888 = vshrl.u32 %v887, 7
        %v889 = vsub.s32 0, %v888
        %v890 = vrot.slane %v885, %v889
        %v891 = vlaneseq
        %v892 = vshrl.u32 %v891, 7
        %v893 = vsub.s32 1, %v892
        %v894 = vrot.slane %v885, %v893
        %v897 = vmul.f32 %v883, %v890
        %v898 = vmul.f32 %v884, %v894
        %899 = vst [vmem:[#allocation2 + $0x80] sm:$0xff] %v897
        %900 = vst [vmem:[#allocation2 + $0x88] sm:$0xff] %v898
        %v901 = vld [vmem:[%s2] sm:$0xff]
        %v902 = vld [vmem:[#allocation2] sm:$0xff]
        %v903 = vld [vmem:[#allocation2 + $0x8] sm:$0xff]
        %v904 = vld [vmem:[#allocation2 + $0x10] sm:$0xff]
        %v905 = vld [vmem:[#allocation2 + $0x18] sm:$0xff]
        %v906 = vld [vmem:[#allocation2 + $0x20] sm:$0xff]
        %v907 = vld [vmem:[#allocation2 + $0x28] sm:$0xff]
        %v908 = vld [vmem:[#allocation2 + $0x30] sm:$0xff]
        %v909 = vld [vmem:[#allocation2 + $0x38] sm:$0xff]
        %v910 = vld [vmem:[#allocation2 + $0x40] sm:$0xff]
        %v911 = vld [vmem:[#allocation2 + $0x48] sm:$0xff]
        %v912 = vld [vmem:[#allocation2 + $0x50] sm:$0xff]
        %v913 = vld [vmem:[#allocation2 + $0x58] sm:$0xff]
        %v914 = vld [vmem:[#allocation2 + $0x60] sm:$0xff]
        %v915 = vld [vmem:[#allocation2 + $0x68] sm:$0xff]
        %v916 = vld [vmem:[#allocation2 + $0x70] sm:$0xff]
        %v917 = vld [vmem:[#allocation2 + $0x78] sm:$0xff]
        %v918 = vld [vmem:[#allocation2 + $0x80] sm:$0xff]
        %v919 = vld [vmem:[#allocation2 + $0x88] sm:$0xff]
        %v921 = vsel %vm618, %v901, 0
        %923 = vmatprep.subr.mxu0 %v903
        %924 = vmatpush1.msra.mxu0 %v902
        %925 = vmatprep.subr.mxu0 %v905
        %926 = vmatpush1.msra.mxu0 %v904
        %927 = vmatprep.subr.mxu0 %v907
        %928 = vmatpush1.msra.mxu0 %v906
        %929 = vmatprep.subr.mxu0 %v909
        %930 = vmatpush1.msra.mxu0 %v908
        %931 = vmatprep.subr.mxu0 %v911
        %932 = vmatpush1.msra.mxu0 %v910
        %933 = vmatprep.subr.mxu0 %v913
        %934 = vmatpush1.msra.mxu0 %v912
        %935 = vmatprep.subr.mxu0 %v915
        %936 = vmatpush1.msra.mxu0 %v914
        %937 = vmatprep.subr.mxu0 %v917
        %938 = vmatpush1.msra.mxu0 %v916
        %939 = vmatprep.subr.mxu0 %v919
        %940 = vmatpush1.msra.mxu0 %v918
        %941 = vmatprep.subr.mxu0 0.0
        %942 = vmatpush1.msra.mxu0 0.0
        %943 = vmatprep.subr.mxu0 0.0
        %944 = vmatpush1.msra.mxu0 0.0
        %945 = vmatprep.subr.mxu0 0.0
        %946 = vmatpush1.msra.mxu0 0.0
        %947 = vmatprep.subr.mxu0 0.0
        %948 = vmatpush1.msra.mxu0 0.0
        %949 = vmatprep.subr.mxu0 0.0
        %950 = vmatpush1.msra.mxu0 0.0
        %951 = vmatprep.subr.mxu0 0.0
        %952 = vmatpush1.msra.mxu0 0.0
        %953 = vmatprep.subr.mxu0 0.0
        %954 = vmatpush1.msra.mxu0 0.0
        %955 = vmatprep.subr.mxu0 0.0
        %956 = vmatpush1.msra.mxu0 0.0
        %957 = vmatprep.subr.mxu0 0.0
        %958 = vmatpush1.msra.mxu0 0.0
        %959 = vmatprep.subr.mxu0 0.0
        %960 = vmatpush1.msra.mxu0 0.0
        %961 = vmatprep.subr.mxu0 0.0
        %962 = vmatpush1.msra.mxu0 0.0
        %963 = vmatprep.subr.mxu0 0.0
        %964 = vmatpush1.msra.mxu0 0.0
        %965 = vmatprep.subr.mxu0 0.0
        %966 = vmatpush1.msra.mxu0 0.0
        %967 = vmatprep.subr.mxu0 0.0
        %968 = vmatpush1.msra.mxu0 0.0
        %969 = vmatprep.subr.mxu0 0.0
        %970 = vmatpush1.msra.mxu0 0.0
        %971 = vmatprep.subr.mxu0 0.0
        %972 = vmatpush1.msra.mxu0 0.0
        %973 = vmatprep.subr.mxu0 0.0
        %974 = vmatpush1.msra.mxu0 0.0
        %975 = vmatprep.subr.mxu0 0.0
        %976 = vmatpush1.msra.mxu0 0.0
        %977 = vmatprep.subr.mxu0 0.0
        %978 = vmatpush1.msra.mxu0 0.0
        %979 = vmatprep.subr.mxu0 0.0
        %980 = vmatpush1.msra.mxu0 0.0
        %981 = vmatprep.subr.mxu0 0.0
        %982 = vmatpush1.msra.mxu0 0.0
        %983 = vmatprep.subr.mxu0 0.0
        %984 = vmatpush1.msra.mxu0 0.0
        %985 = vmatprep.subr.mxu0 0.0
        %986 = vmatpush1.msra.mxu0 0.0
        %987 = vmatprep.mubr.f32.mxu0 0.0
        %988 = vmatmul.mubr.f32.gmra.mrb[0].mxu0 %v921
        %v989 = vpop.f32.mrb[0].mxu0
        %v990 = vadd.f32 0.0, %v989
        %v991 = vpop.f32.mrb[0].mxu0
        %v992 = vadd.f32 0.0, %v991
        %993 = vdwg.mxu0
        %v994 = vld [vmem:[%s8] sm:$0xff]
        %996 = vset.pattern.permute.xlu0 0
        %997 = vperm.xlu0 %996, %v994
        %v998 = vpop.permute.xlu0 %997
        %v1000 = vmul.f32 %v990, %v998
        %v1001 = vmul.f32 %v992, %v998
        %v1002 = vld [vmem:[%s9] sm:$0xff]
        %1004 = vset.pattern.permute.xlu0 0
        %1005 = vperm.xlu0 %1004, %v1002
        %v1006 = vpop.permute.xlu0 %1005
        %v1008 = vadd.f32 %v1000, %v1006
        %v1009 = vadd.f32 %v1001, %v1006
        %v1010 = vadd.f32 %v1008, %v371
        %v1011 = vadd.f32 %v1009, %v372
        %1012 = vst [vmem:[%s365] sm:$0xff] %v1010
        %1013 = vst [vmem:[%s365 + $0x8] sm:$0xff] %v1011
        %s1014 = sand.u32 %s248, 1
        %s1015 = scalar_lea.sflag [#allocation5], %s1014
        %s1016 = sand.u32 %s248, 1
        %s1017 = smul.addr %s1016, 16
        %s1018 = scalar_lea.vmem [#allocation6], %s1017
        // Predicated region
        $region65: #{tpu_custom_call.1} parent=59 // pred_check
          %p1019 = pneg %p258
        $region66: #{tpu_custom_call.1} parent=59 // pred_check_branch
          %1021 = sbr.rel (%p1019) target = $region68
        $region67: #{tpu_custom_call.1} parent=59 // pred_region
          %s1023 = ssub.s32 256, 256
          %1024 = vsyncadd %s1015, %s1023
          %s1025 = smul.addr %s25, 2
          %s1026 = smul.addr %s1025, 128
          %s1027 = scalar_lea.hbm %s10, %s1026
          %s1029 = sshll.u32 %s1018, 4
          %s1030 = int_to_ptr.vmem [resolvable:$true] %s1029
          %1032 = dma.vmem_to_hbm [thread:$0]  %s1030, 256, %s1027, %s1015
        $region68: #{tpu_custom_call.1} parent=59 // pred_fallthru
          _
      $region60: #{tpu_custom_call.1} parent=5 // pred_fallthru
        _
      %p1033 = scmp.le.s32.totalorder 2, %s20
      // Predicated region
      $region69: #{tpu_custom_call.1} parent=5 // pred_check
        %p1034 = pneg %p1033
      $region70: #{tpu_custom_call.1} parent=5 // pred_check_branch
        %1036 = sbr.rel (%p1034) target = $region72
      $region71: #{tpu_custom_call.1} parent=5 // pred_region
        %s1037 = ssub.s32 %s20, 2
        // Predicated region
        $region73: #{tpu_custom_call.1} parent=71 // pred_check
          %p1038 = pneg %p264
        $region74: #{tpu_custom_call.1} parent=71 // pred_check_branch
          %1040 = sbr.rel (%p1038) target = $region76
        $region75: #{tpu_custom_call.1} parent=71 // pred_region
          %s1041 = sand.u32 %s249, 1
          %s1042 = scalar_lea.sflag [#allocation5], %s1041
          %s1043 = sand.u32 %s249, 1
          %s1044 = smul.addr %s1043, 16
          %s1045 = scalar_lea.vmem [#allocation6], %s1044
          %1046 = dma.done %s1042, 256
        $region76: #{tpu_custom_call.1} parent=71 // pred_fallthru
          _
      $region72: #{tpu_custom_call.1} parent=5 // pred_fallthru
        _
    $region6: #{tpu_custom_call.1} parent=1 // loop_footer
      %s24 = sadd.s32 1, %s20
    $region7: #{tpu_custom_call.1} parent=1 // loop_footer_branch
      %19 = sbr.rel target = $region3
    $region8: #{tpu_custom_call.1} parent=1 // loop_exit
      _
    %1047 = vsyncpa [#allocation4], 1
    %s1048 = scalar_lea.sflag [#allocation4], 1
    %1049 = vsyncpa %s1048, 1
    %1050 = vsyncpa [#allocation5], 1
    %s1051 = scalar_lea.sflag [#allocation5], 1
    %1052 = vsyncpa %s1051, 1

</llo_original>
